<compile_context>
chip_gen: v6e
topology: v6e:2x2x1
jax: 0.10.0
libtpu: 0.0.40
codegen_flags: <defaults>
</compile_context>

<pallas_src>
import functools

import jax
import jax.numpy as jnp
from jax.experimental import pallas as pl
from jax.experimental.pallas import tpu as pltpu


def _guided_filter_kernel(x_ref, y_ref, inv_nh_ref, inv_nw_ref, o_ref, *,
                          radius: int, eps: float):
    r = radius
    x = x_ref[...].astype(jnp.float32)          # (Cb, H, W) input plane chunk
    y = y_ref[...].astype(jnp.float32)          # (Cb, H, W) guide plane chunk
    cb, h, w = x.shape

    # 1 / per-pixel window count, separable (precomputed outside the kernel).
    inv_n = inv_nh_ref[...] * inv_nw_ref[...]   # (H, 1) * (1, W) -> (H, W)

    def box(t):
        """Edge-clipped (2r+1)x(2r+1) window sum via 2*(2r) shifted adds."""
        p = t.shape[0]
        # rows (sublane axis)
        zr = jnp.zeros((p, r, w), jnp.float32)
        tp = jnp.concatenate([zr, t, zr], axis=1)        # (p, H+2r, W)
        acc = tp[:, 0:h, :]
        for d in range(1, 2 * r + 1):                    # unrolled at trace time
            acc = acc + tp[:, d:d + h, :]
        # cols (lane axis)
        zc = jnp.zeros((p, h, r), jnp.float32)
        tp = jnp.concatenate([zc, acc, zc], axis=2)      # (p, H, W+2r)
        out = tp[:, :, 0:w]
        for d in range(1, 2 * r + 1):
            out = out + tp[:, :, d:d + w]
        return out

    # One batched box pass over the four statistics planes.
    stats = jnp.concatenate([x, y, x * y, x * x], axis=0)     # (4*Cb, H, W)
    means = box(stats) * inv_n
    mean_x  = means[0 * cb:1 * cb]
    mean_y  = means[1 * cb:2 * cb]
    mean_xy = means[2 * cb:3 * cb]
    mean_xx = means[3 * cb:4 * cb]

    cov_xy = mean_xy - mean_x * mean_y
    var_x  = mean_xx - mean_x * mean_x   # NOTE: faithful to the reference; can
                                         # go slightly negative for constant
                                         # patches (reference shares this).

    # A = cov_xy / (var_x + eps): EUP approx reciprocal + one Newton step.
    denom = var_x + eps
    inv = pl.reciprocal(denom, approx=True)
    inv = inv * (2.0 - denom * inv)
    A = cov_xy * inv
    b = mean_y - A * mean_x

    # Second batched box pass over [A, b].
    mab = box(jnp.concatenate([A, b], axis=0)) * inv_n        # (2*Cb, H, W)
    mean_A = mab[0:cb]
    mean_b = mab[cb:2 * cb]

    o_ref[...] = (mean_A * x + mean_b).astype(o_ref.dtype)


def guided_filter(x: jax.Array, y: jax.Array, *, kernel_size: int,
                  eps: float = 1e-8, c_block: int = 4):
    """Pallas GuidedFilter forward. x: (N, Cx, H, W) input, y: (N, C, H, W) guide.

    Cx must be 1 or equal to C (PyTorch semantics). Output: (N, C, H, W).
    """
    r = int((kernel_size - 1) / 2)

    n_x, c_x, h_x, w_x = x.shape
    n_y, c_y, h_y, w_y = y.shape
    assert n_x == n_y
    assert c_x == 1 or c_x == c_y
    assert h_x == h_y and w_x == w_y
    assert h_x > 2 * r + 1 and w_x > 2 * r + 1

    # Broadcasting a single-channel input across guide channels is glue.
    if c_x == 1 and c_y > 1:
        x = jnp.broadcast_to(x, y.shape)

    N, C, H, W = y.shape
    NC = N * C
    xf = x.reshape(NC, H, W)
    yf = y.reshape(NC, H, W)

    # Channel-chunk the grid; pad N*C to a multiple of the chunk size with
    # zero planes (their output is 0 and is sliced off below).
    cb = max(1, min(c_block, NC))
    nc_pad = pl.cdiv(NC, cb) * cb
    if nc_pad != NC:
        pad = nc_pad - NC
        xf = jnp.concatenate([xf, jnp.zeros((pad, H, W), xf.dtype)], axis=0)
        yf = jnp.concatenate([yf, jnp.zeros((pad, H, W), yf.dtype)], axis=0)

    # Separable 1 / per-pixel window-pixel-count (replaces box(ones) + divides).
    ih = jnp.arange(H)
    iw = jnp.arange(W)
    cnt_h = (jnp.minimum(ih + r, H - 1) - jnp.maximum(ih - r, 0) + 1).astype(jnp.float32)
    cnt_w = (jnp.minimum(iw + r, W - 1) - jnp.maximum(iw - r, 0) + 1).astype(jnp.float32)
    inv_nh = (1.0 / cnt_h).reshape(H, 1)
    inv_nw = (1.0 / cnt_w).reshape(1, W)

    grid = (nc_pad // cb,)
    kernel = functools.partial(_guided_filter_kernel, radius=r, eps=eps)

    # 6 box-filtered planes * 4r adds/pixel + ~22 elementwise flops/pixel.
    flops_per_px = 6 * 4 * r + 22
    cost = pl.CostEstimate(
        flops=int(nc_pad * H * W * flops_per_px),
        transcendentals=int(nc_pad * H * W),
        bytes_accessed=int(3 * nc_pad * H * W * xf.dtype.itemsize),
    )

    out = pl.pallas_call(
        kernel,
        out_shape=jax.ShapeDtypeStruct((nc_pad, H, W), y.dtype),
        grid_spec=pltpu.PrefetchScalarGridSpec(
            num_scalar_prefetch=0,
            grid=grid,
            in_specs=[
                pl.BlockSpec((cb, H, W), lambda i: (i, 0, 0)),   # x chunk
                pl.BlockSpec((cb, H, W), lambda i: (i, 0, 0)),   # y chunk
                pl.BlockSpec((H, 1), lambda i: (0, 0)),          # 1/count_h (constant)
                pl.BlockSpec((1, W), lambda i: (0, 0)),          # 1/count_w (constant)
            ],
            out_specs=pl.BlockSpec((cb, H, W), lambda i: (i, 0, 0)),
        ),
        compiler_params=pltpu.CompilerParams(
            dimension_semantics=("parallel",)),
        cost_estimate=cost,
    )(xf, yf, inv_nh, inv_nw)

    return out[:NC].reshape(N, C, H, W)


def _guided_filter_ref(x, y, *, kernel_size: int, eps: float = 1e-8):
    """Pure-JAX reference mirroring the PyTorch cumsum-based BoxFilter."""
    r = int((kernel_size - 1) / 2)

    def diff_x(t):
        left = t[:, :, r:2 * r + 1]
        middle = t[:, :, 2 * r + 1:] - t[:, :, :-2 * r - 1]
        right = t[:, :, -1:] - t[:, :, -2 * r - 1:-r - 1]
        return jnp.concatenate([left, middle, right], axis=2)

    def diff_y(t):
        left = t[:, :, :, r:2 * r + 1]
        middle = t[:, :, :, 2 * r + 1:] - t[:, :, :, :-2 * r - 1]
        right = t[:, :, :, -1:] - t[:, :, :, -2 * r - 1:-r - 1]
        return jnp.concatenate([left, middle, right], axis=3)

    def box(t):
        return diff_y(diff_x(jnp.cumsum(t, axis=2)).cumsum(axis=3))

    _, _, H, W = x.shape
    n = box(jnp.ones((1, 1, H, W), x.dtype))
    mean_x = box(x) / n
    mean_y = box(y) / n
    cov_xy = box(x * y) / n - mean_x * mean_y
    var_x = box(x * x) / n - mean_x * mean_x
    A = cov_xy / (var_x + eps)
    b = mean_y - A * mean_x
    mean_A = box(A) / n
    mean_b = box(b) / n
    return mean_A * x + mean_b


if __name__ == "__main__":
    key = jax.random.PRNGKey(0)
    kx, ky = jax.random.split(key)

    N, C, H, W = 2, 4, 16, 16
    kernel_size = 5   # radius = 2; requires H, W > 2*r + 1 = 5
    eps = 1e-8

    x = jax.random.uniform(kx, (N, C, H, W), dtype=jnp.float32)
    y = jax.random.uniform(ky, (N, C, H, W), dtype=jnp.float32)

    out = guided_filter(x, y, kernel_size=kernel_size, eps=eps)
    out = jax.block_until_ready(out)

    ref = _guided_filter_ref(x, y, kernel_size=kernel_size, eps=eps)
    assert out.shape == (N, C, H, W)
    assert jnp.allclose(out, ref, rtol=1e-3, atol=1e-3), \
        float(jnp.max(jnp.abs(out - ref)))

    print("KERNEL_OK")
</pallas_src>

<mosaic_0001>
module attributes {stable_mosaic.version = 11 : i64} {
  func.func @_guided_filter_kernel(%arg0: i32, %arg1: memref<4x16x16xf32, #tpu.memory_space<vmem>>, %arg2: memref<4x16x16xf32, #tpu.memory_space<vmem>>, %arg3: memref<16x1xf32, #tpu.memory_space<vmem>>, %arg4: memref<1x16xf32, #tpu.memory_space<vmem>>, %arg5: memref<4x16x16xf32, #tpu.memory_space<vmem>>) attributes {dimension_semantics = [#tpu.dimension_semantics<parallel>], iteration_bounds = array<i64: 2>, scalar_prefetch = 0 : i64, scratch_operands = 0 : i64, tpu.core_type = #tpu.core_type<tc>, window_params = [{transform_indices = @transform_0, window_bounds = array<i64: 4, 16, 16>}, {transform_indices = @transform_1, window_bounds = array<i64: 4, 16, 16>}, {pipeline_mode = #tpu.pipeline_mode<synchronous>, transform_indices = @transform_2, window_bounds = array<i64: 16, 1>}, {pipeline_mode = #tpu.pipeline_mode<synchronous>, transform_indices = @transform_3, window_bounds = array<i64: 1, 16>}, {transform_indices = @transform_4, window_bounds = array<i64: 4, 16, 16>}]} {
    %c0 = arith.constant 0 : index
    %c0_0 = arith.constant 0 : index
    %c0_1 = arith.constant 0 : index
    %0 = vector.load %arg1[%c0, %c0_0, %c0_1] : memref<4x16x16xf32, #tpu.memory_space<vmem>>, vector<4x16x16xf32>
    %c0_2 = arith.constant 0 : index
    %c0_3 = arith.constant 0 : index
    %c0_4 = arith.constant 0 : index
    %1 = vector.load %arg2[%c0_2, %c0_3, %c0_4] : memref<4x16x16xf32, #tpu.memory_space<vmem>>, vector<4x16x16xf32>
    %c0_5 = arith.constant 0 : index
    %c0_6 = arith.constant 0 : index
    %2 = vector.load %arg3[%c0_5, %c0_6] : memref<16x1xf32, #tpu.memory_space<vmem>>, vector<16x1xf32>
    %c0_7 = arith.constant 0 : index
    %c0_8 = arith.constant 0 : index
    %3 = vector.load %arg4[%c0_7, %c0_8] : memref<1x16xf32, #tpu.memory_space<vmem>>, vector<1x16xf32>
    %4 = vector.broadcast %2 : vector<16x1xf32> to vector<16x16xf32>
    %5 = vector.broadcast %3 : vector<1x16xf32> to vector<16x16xf32>
    %6 = arith.mulf %4, %5 : vector<16x16xf32>
    %7 = arith.mulf %0, %1 : vector<4x16x16xf32>
    %8 = arith.mulf %0, %0 : vector<4x16x16xf32>
    %9 = tpu.concatenate %0, %1, %7, %8 in 0 : vector<4x16x16xf32>, vector<4x16x16xf32>, vector<4x16x16xf32>, vector<4x16x16xf32> -> vector<16x16x16xf32>
    %cst = arith.constant 0.000000e+00 : f32
    %10 = vector.broadcast %cst : f32 to vector<16x2x16xf32>
    %11 = tpu.concatenate %10, %9, %10 in 1 : vector<16x2x16xf32>, vector<16x16x16xf32>, vector<16x2x16xf32> -> vector<16x20x16xf32>
    %12 = vector.extract_strided_slice %11 {offsets = [0, 0, 0], sizes = [16, 16, 16], strides = [1, 1, 1]} : vector<16x20x16xf32> to vector<16x16x16xf32>
    %13 = vector.extract_strided_slice %11 {offsets = [0, 1, 0], sizes = [16, 16, 16], strides = [1, 1, 1]} : vector<16x20x16xf32> to vector<16x16x16xf32>
    %14 = arith.addf %12, %13 : vector<16x16x16xf32>
    %15 = vector.extract_strided_slice %11 {offsets = [0, 2, 0], sizes = [16, 16, 16], strides = [1, 1, 1]} : vector<16x20x16xf32> to vector<16x16x16xf32>
    %16 = arith.addf %14, %15 : vector<16x16x16xf32>
    %17 = vector.extract_strided_slice %11 {offsets = [0, 3, 0], sizes = [16, 16, 16], strides = [1, 1, 1]} : vector<16x20x16xf32> to vector<16x16x16xf32>
    %18 = arith.addf %16, %17 : vector<16x16x16xf32>
    %19 = vector.extract_strided_slice %11 {offsets = [0, 4, 0], sizes = [16, 16, 16], strides = [1, 1, 1]} : vector<16x20x16xf32> to vector<16x16x16xf32>
    %20 = arith.addf %18, %19 : vector<16x16x16xf32>
    %cst_9 = arith.constant 0.000000e+00 : f32
    %21 = vector.broadcast %cst_9 : f32 to vector<16x16x2xf32>
    %22 = tpu.concatenate %21, %20, %21 in 2 : vector<16x16x2xf32>, vector<16x16x16xf32>, vector<16x16x2xf32> -> vector<16x16x20xf32>
    %23 = vector.extract_strided_slice %22 {offsets = [0, 0, 0], sizes = [16, 16, 16], strides = [1, 1, 1]} : vector<16x16x20xf32> to vector<16x16x16xf32>
    %24 = vector.extract_strided_slice %22 {offsets = [0, 0, 1], sizes = [16, 16, 16], strides = [1, 1, 1]} : vector<16x16x20xf32> to vector<16x16x16xf32>
    %25 = arith.addf %23, %24 : vector<16x16x16xf32>
    %26 = vector.extract_strided_slice %22 {offsets = [0, 0, 2], sizes = [16, 16, 16], strides = [1, 1, 1]} : vector<16x16x20xf32> to vector<16x16x16xf32>
    %27 = arith.addf %25, %26 : vector<16x16x16xf32>
    %28 = vector.extract_strided_slice %22 {offsets = [0, 0, 3], sizes = [16, 16, 16], strides = [1, 1, 1]} : vector<16x16x20xf32> to vector<16x16x16xf32>
    %29 = arith.addf %27, %28 : vector<16x16x16xf32>
    %30 = vector.extract_strided_slice %22 {offsets = [0, 0, 4], sizes = [16, 16, 16], strides = [1, 1, 1]} : vector<16x16x20xf32> to vector<16x16x16xf32>
    %31 = arith.addf %29, %30 : vector<16x16x16xf32>
    %32 = vector.shape_cast %6 : vector<16x16xf32> to vector<1x16x16xf32>
    %33 = vector.broadcast %32 : vector<1x16x16xf32> to vector<16x16x16xf32>
    %34 = arith.mulf %31, %33 : vector<16x16x16xf32>
    %35 = vector.extract_strided_slice %34 {offsets = [0, 0, 0], sizes = [4, 16, 16], strides = [1, 1, 1]} : vector<16x16x16xf32> to vector<4x16x16xf32>
    %36 = vector.extract_strided_slice %34 {offsets = [4, 0, 0], sizes = [4, 16, 16], strides = [1, 1, 1]} : vector<16x16x16xf32> to vector<4x16x16xf32>
    %37 = vector.extract_strided_slice %34 {offsets = [8, 0, 0], sizes = [4, 16, 16], strides = [1, 1, 1]} : vector<16x16x16xf32> to vector<4x16x16xf32>
    %38 = vector.extract_strided_slice %34 {offsets = [12, 0, 0], sizes = [4, 16, 16], strides = [1, 1, 1]} : vector<16x16x16xf32> to vector<4x16x16xf32>
    %39 = arith.mulf %35, %36 : vector<4x16x16xf32>
    %40 = arith.subf %37, %39 : vector<4x16x16xf32>
    %41 = arith.mulf %35, %35 : vector<4x16x16xf32>
    %42 = arith.subf %38, %41 : vector<4x16x16xf32>
    %cst_10 = arith.constant 9.99999993E-9 : f32
    %43 = vector.broadcast %cst_10 : f32 to vector<4x16x16xf32>
    %44 = arith.addf %42, %43 : vector<4x16x16xf32>
    %45 = tpu.reciprocal %44 {approx = true} : vector<4x16x16xf32> -> vector<4x16x16xf32>
    %46 = arith.mulf %44, %45 : vector<4x16x16xf32>
    %cst_11 = arith.constant 2.000000e+00 : f32
    %47 = vector.broadcast %cst_11 : f32 to vector<4x16x16xf32>
    %48 = arith.subf %47, %46 : vector<4x16x16xf32>
    %49 = arith.mulf %45, %48 : vector<4x16x16xf32>
    %50 = arith.mulf %40, %49 : vector<4x16x16xf32>
    %51 = arith.mulf %50, %35 : vector<4x16x16xf32>
    %52 = arith.subf %36, %51 : vector<4x16x16xf32>
    %53 = tpu.concatenate %50, %52 in 0 : vector<4x16x16xf32>, vector<4x16x16xf32> -> vector<8x16x16xf32>
    %cst_12 = arith.constant 0.000000e+00 : f32
    %54 = vector.broadcast %cst_12 : f32 to vector<8x2x16xf32>
    %55 = tpu.concatenate %54, %53, %54 in 1 : vector<8x2x16xf32>, vector<8x16x16xf32>, vector<8x2x16xf32> -> vector<8x20x16xf32>
    %56 = vector.extract_strided_slice %55 {offsets = [0, 0, 0], sizes = [8, 16, 16], strides = [1, 1, 1]} : vector<8x20x16xf32> to vector<8x16x16xf32>
    %57 = vector.extract_strided_slice %55 {offsets = [0, 1, 0], sizes = [8, 16, 16], strides = [1, 1, 1]} : vector<8x20x16xf32> to vector<8x16x16xf32>
    %58 = arith.addf %56, %57 : vector<8x16x16xf32>
    %59 = vector.extract_strided_slice %55 {offsets = [0, 2, 0], sizes = [8, 16, 16], strides = [1, 1, 1]} : vector<8x20x16xf32> to vector<8x16x16xf32>
    %60 = arith.addf %58, %59 : vector<8x16x16xf32>
    %61 = vector.extract_strided_slice %55 {offsets = [0, 3, 0], sizes = [8, 16, 16], strides = [1, 1, 1]} : vector<8x20x16xf32> to vector<8x16x16xf32>
    %62 = arith.addf %60, %61 : vector<8x16x16xf32>
    %63 = vector.extract_strided_slice %55 {offsets = [0, 4, 0], sizes = [8, 16, 16], strides = [1, 1, 1]} : vector<8x20x16xf32> to vector<8x16x16xf32>
    %64 = arith.addf %62, %63 : vector<8x16x16xf32>
    %cst_13 = arith.constant 0.000000e+00 : f32
    %65 = vector.broadcast %cst_13 : f32 to vector<8x16x2xf32>
    %66 = tpu.concatenate %65, %64, %65 in 2 : vector<8x16x2xf32>, vector<8x16x16xf32>, vector<8x16x2xf32> -> vector<8x16x20xf32>
    %67 = vector.extract_strided_slice %66 {offsets = [0, 0, 0], sizes = [8, 16, 16], strides = [1, 1, 1]} : vector<8x16x20xf32> to vector<8x16x16xf32>
    %68 = vector.extract_strided_slice %66 {offsets = [0, 0, 1], sizes = [8, 16, 16], strides = [1, 1, 1]} : vector<8x16x20xf32> to vector<8x16x16xf32>
    %69 = arith.addf %67, %68 : vector<8x16x16xf32>
    %70 = vector.extract_strided_slice %66 {offsets = [0, 0, 2], sizes = [8, 16, 16], strides = [1, 1, 1]} : vector<8x16x20xf32> to vector<8x16x16xf32>
    %71 = arith.addf %69, %70 : vector<8x16x16xf32>
    %72 = vector.extract_strided_slice %66 {offsets = [0, 0, 3], sizes = [8, 16, 16], strides = [1, 1, 1]} : vector<8x16x20xf32> to vector<8x16x16xf32>
    %73 = arith.addf %71, %72 : vector<8x16x16xf32>
    %74 = vector.extract_strided_slice %66 {offsets = [0, 0, 4], sizes = [8, 16, 16], strides = [1, 1, 1]} : vector<8x16x20xf32> to vector<8x16x16xf32>
    %75 = arith.addf %73, %74 : vector<8x16x16xf32>
    %76 = vector.shape_cast %6 : vector<16x16xf32> to vector<1x16x16xf32>
    %77 = vector.broadcast %76 : vector<1x16x16xf32> to vector<8x16x16xf32>
    %78 = arith.mulf %75, %77 : vector<8x16x16xf32>
    %79 = vector.extract_strided_slice %78 {offsets = [0, 0, 0], sizes = [4, 16, 16], strides = [1, 1, 1]} : vector<8x16x16xf32> to vector<4x16x16xf32>
    %80 = vector.extract_strided_slice %78 {offsets = [4, 0, 0], sizes = [4, 16, 16], strides = [1, 1, 1]} : vector<8x16x16xf32> to vector<4x16x16xf32>
    %81 = arith.mulf %79, %0 : vector<4x16x16xf32>
    %82 = arith.addf %81, %80 : vector<4x16x16xf32>
    %c0_14 = arith.constant 0 : index
    %c0_15 = arith.constant 0 : index
    %c0_16 = arith.constant 0 : index
    %83 = vector.load %arg5[%c0_14, %c0_15, %c0_16] : memref<4x16x16xf32, #tpu.memory_space<vmem>>, vector<4x16x16xf32>
    tpu.vector_store %arg5[%c0_14, %c0_15, %c0_16], %82 {strides = array<i32>} : memref<4x16x16xf32, #tpu.memory_space<vmem>>, vector<4x16x16xf32>,
    return
  }
  func.func @transform_0(%arg0: i32) -> (i32, i32, i32) {
    %c0_i32 = arith.constant 0 : i32
    %c0_i32_0 = arith.constant 0 : i32
    %c0_i32_1 = arith.constant 0 : i32
    return %arg0, %c0_i32, %c0_i32_0 : i32, i32, i32
  }
  func.func @transform_1(%arg0: i32) -> (i32, i32, i32) {
    %c0_i32 = arith.constant 0 : i32
    %c0_i32_0 = arith.constant 0 : i32
    %c0_i32_1 = arith.constant 0 : i32
    return %arg0, %c0_i32, %c0_i32_0 : i32, i32, i32
  }
  func.func @transform_2(%arg0: i32) -> (i32, i32) {
    %c0_i32 = arith.constant 0 : i32
    %c0_i32_0 = arith.constant 0 : i32
    %c0_i32_1 = arith.constant 0 : i32
    return %c0_i32, %c0_i32_0 : i32, i32
  }
  func.func @transform_3(%arg0: i32) -> (i32, i32) {
    %c0_i32 = arith.constant 0 : i32
    %c0_i32_0 = arith.constant 0 : i32
    %c0_i32_1 = arith.constant 0 : i32
    return %c0_i32, %c0_i32_0 : i32, i32
  }
  func.func @transform_4(%arg0: i32) -> (i32, i32, i32) {
    %c0_i32 = arith.constant 0 : i32
    %c0_i32_0 = arith.constant 0 : i32
    %c0_i32_1 = arith.constant 0 : i32
    return %arg0, %c0_i32, %c0_i32_0 : i32, i32, i32
  }
}

</mosaic_0001>

<llo_original>
// kernel: tpu_custom_call.1
$region0: #{tpu_custom_call.1}
  #allocation0 [shape = 'u32[]', space=smem, size = 0x4, offset = 0x4, fixed_abs, tag = 'smem constant byte address 0x4 - core index']
  #allocation1 [shape = 'u32[144,128]{1,0:T(1,128)}', space=vmem, size = 0x12000, scoped, tag = 'internal scratch']
  %s0 = inlined_call_operand.hbm [shape: f32[8,16,16], index: 0, kind: input, shape index: {}]
  %s1 = inlined_call_operand.hbm [shape: f32[8,16,16], index: 1, kind: input, shape index: {}]
  %s2 = inlined_call_operand.vmem [shape: f32[16,1], index: 2, kind: input, shape index: {}]
  %s3 = inlined_call_operand.vmem [shape: f32[1,16], index: 3, kind: input, shape index: {}]
  %s4 = inlined_call_operand.hbm [shape: f32[8,16,16], index: 4, kind: output, shape index: {}]
  %s5 = sld [smem:[#allocation0]]
  $region57: #{tpu_custom_call.1} parent=0
    _
  %s7 = ssub.s32 1, %s5
  %s8 = scalar_select 0, %s7, %s5
  $region1: #{tpu_custom_call.1} parent=0
    #allocation2 [shape = 'u8[65536]{0}', space=vmem, size = 0x10000, scoped, tag = 'input window, operand 0']
    #allocation3 [shape = 's32[2]{0}', space=sflag, size = 0x8, scoped, tag = 'scoped memory for tpu_custom_call.1']
    #allocation4 [shape = 's32[2]{0}', space=sflag, size = 0x8, scoped, tag = 'scoped memory for tpu_custom_call.1']
    #allocation5 [shape = 'u8[65536]{0}', space=vmem, size = 0x10000, scoped, tag = 'input window, operand 1']
    #allocation6 [shape = 's32[2]{0}', space=sflag, size = 0x8, scoped, tag = 'scoped memory for tpu_custom_call.1']
    #allocation7 [shape = 'u8[65536]{0}', space=vmem, size = 0x10000, scoped, tag = 'output window, operand 0']
    %9 = vsyncpa [#allocation3], 0
    %s10 = scalar_lea.sflag [#allocation3], 1
    %11 = vsyncpa %s10, 0
    %12 = vsyncpa [#allocation6], 0
    %s13 = scalar_lea.sflag [#allocation6], 1
    %14 = vsyncpa %s13, 0
    %15 = vsyncpa [#allocation4], 0
    %s16 = scalar_lea.sflag [#allocation4], 1
    %17 = vsyncpa %s16, 0
    loop: start=0, step=1, limit=4
    $region2: #{tpu_custom_call.1} parent=1 // loop_pre_header
      _
    $region3: #{tpu_custom_call.1} parent=1 // loop_header
      %s19 = sphi 0, %s23
      %p20 = scmp.ge.s32.totalorder %s19, 4
      %s29 = sphi 0, %s31
      %s32 = sphi 0, %s29
      %s33 = sphi 0, %s32
      %s49 = sphi 0, %s33
      %s55 = sphi 0, %s57
      %s58 = sphi 0, %s55
      %s59 = sphi 0, %s58
      %s75 = sphi 0, %s59
      %s79 = sphi 0, %s79
      %s81 = sphi 0, %s79
      %s82 = sphi 0, %s81
      %s96 = sphi 0, %s82
      %s100 = sphi 0, %s100
      %s102 = sphi 0, %s100
      %s103 = sphi 0, %s102
      %s117 = sphi 0, %s103
      %s123 = sphi 0, %s125
      %s126 = sphi 0, %s123
      %s127 = sphi 0, %s126
      %s143 = sphi 0, %s127
    $region4: #{tpu_custom_call.1} parent=1 // loop_header_branch
      %22 = sbr.rel (%p20) target = $region8
    $region5: #{tpu_custom_call.1} parent=1 // loop_body
      %s24 = ssub.s32 %s19, 1
      %s25 = ssub.s32 %s19, 2
      %s26 = sadd.s32 %s19, 1
      %s27 = ssub.s32 %s19, %s26
      %p28 = scmp.eq.s32.totalorder %s27, 0
      %s30 = sadd.s32 %s29, 1
      %s31 = scalar_select %p28, %s29, %s30
      %p34 = pneg %p28
      %p35 = scmp.eq.s32.totalorder %s19, 1
      %p36 = por %p34, %p35
      %p37 = scmp.ne.s32.totalorder %s29, %s32
      %p38 = scmp.eq.s32.totalorder %s19, 0
      %p39 = por %p37, %p38
      %p40 = scmp.ne.s32.totalorder %s29, %s32
      %p41 = scmp.eq.s32.totalorder %s24, 1
      %p42 = por %p40, %p41
      %p43 = scmp.ne.s32.totalorder %s32, %s33
      %p44 = scmp.eq.s32.totalorder %s24, 0
      %p45 = por %p43, %p44
      %p46 = scmp.ne.s32.totalorder %s32, %s33
      %p47 = scmp.eq.s32.totalorder %s25, 1
      %p48 = por %p46, %p47
      %p50 = scmp.ne.s32.totalorder %s33, %s49
      %p51 = scmp.eq.s32.totalorder %s25, 0
      %p52 = por %p50, %p51
      %s53 = ssub.s32 %s19, %s26
      %p54 = scmp.eq.s32.totalorder %s53, 0
      %s56 = sadd.s32 %s55, 1
      %s57 = scalar_select %p54, %s55, %s56
      %p60 = pneg %p54
      %p61 = scmp.eq.s32.totalorder %s19, 1
      %p62 = por %p60, %p61
      %p63 = scmp.ne.s32.totalorder %s55, %s58
      %p64 = scmp.eq.s32.totalorder %s19, 0
      %p65 = por %p63, %p64
      %p66 = scmp.ne.s32.totalorder %s55, %s58
      %p67 = scmp.eq.s32.totalorder %s24, 1
      %p68 = por %p66, %p67
      %p69 = scmp.ne.s32.totalorder %s58, %s59
      %p70 = scmp.eq.s32.totalorder %s24, 0
      %p71 = por %p69, %p70
      %p72 = scmp.ne.s32.totalorder %s58, %s59
      %p73 = scmp.eq.s32.totalorder %s25, 1
      %p74 = por %p72, %p73
      %p76 = scmp.ne.s32.totalorder %s59, %s75
      %p77 = scmp.eq.s32.totalorder %s25, 0
      %p78 = por %p76, %p77
      %s80 = sadd.s32 %s79, 1
      %p83 = scmp.eq.s32.totalorder %s19, 1
      %p84 = scmp.ne.s32.totalorder %s79, %s81
      %p85 = scmp.eq.s32.totalorder %s19, 0
      %p86 = por %p84, %p85
      %p87 = scmp.ne.s32.totalorder %s79, %s81
      %p88 = scmp.eq.s32.totalorder %s24, 1
      %p89 = por %p87, %p88
      %p90 = scmp.ne.s32.totalorder %s81, %s82
      %p91 = scmp.eq.s32.totalorder %s24, 0
      %p92 = por %p90, %p91
      %p93 = scmp.ne.s32.totalorder %s81, %s82
      %p94 = scmp.eq.s32.totalorder %s25, 1
      %p95 = por %p93, %p94
      %p97 = scmp.ne.s32.totalorder %s82, %s96
      %p98 = scmp.eq.s32.totalorder %s25, 0
      %p99 = por %p97, %p98
      %s101 = sadd.s32 %s100, 1
      %p104 = scmp.eq.s32.totalorder %s19, 1
      %p105 = scmp.ne.s32.totalorder %s100, %s102
      %p106 = scmp.eq.s32.totalorder %s19, 0
      %p107 = por %p105, %p106
      %p108 = scmp.ne.s32.totalorder %s100, %s102
      %p109 = scmp.eq.s32.totalorder %s24, 1
      %p110 = por %p108, %p109
      %p111 = scmp.ne.s32.totalorder %s102, %s103
      %p112 = scmp.eq.s32.totalorder %s24, 0
      %p113 = por %p111, %p112
      %p114 = scmp.ne.s32.totalorder %s102, %s103
      %p115 = scmp.eq.s32.totalorder %s25, 1
      %p116 = por %p114, %p115
      %p118 = scmp.ne.s32.totalorder %s103, %s117
      %p119 = scmp.eq.s32.totalorder %s25, 0
      %p120 = por %p118, %p119
      %s121 = ssub.s32 %s19, %s26
      %p122 = scmp.eq.s32.totalorder %s121, 0
      %s124 = sadd.s32 %s123, 1
      %s125 = scalar_select %p122, %s123, %s124
      %p128 = pneg %p122
      %p129 = scmp.eq.s32.totalorder %s19, 1
      %p130 = por %p128, %p129
      %p131 = scmp.ne.s32.totalorder %s123, %s126
      %p132 = scmp.eq.s32.totalorder %s19, 0
      %p133 = por %p131, %p132
      %p134 = scmp.ne.s32.totalorder %s123, %s126
      %p135 = scmp.eq.s32.totalorder %s24, 1
      %p136 = por %p134, %p135
      %p137 = scmp.ne.s32.totalorder %s126, %s127
      %p138 = scmp.eq.s32.totalorder %s24, 0
      %p139 = por %p137, %p138
      %p140 = scmp.ne.s32.totalorder %s126, %s127
      %p141 = scmp.eq.s32.totalorder %s25, 1
      %p142 = por %p140, %p141
      %p144 = scmp.ne.s32.totalorder %s127, %s143
      %p145 = scmp.eq.s32.totalorder %s25, 0
      %p146 = por %p144, %p145
      %p147 = scmp.le.s32.totalorder 1, %s19
      %p148 = scmp.lt.s32.totalorder %s19, 3
      %p149 = pnand %p147, %p148
      %p150 = pneg %p149
      // Predicated region
      $region9: #{tpu_custom_call.1} parent=5 // pred_check
        _
      $region10: #{tpu_custom_call.1} parent=5 // pred_check_branch
        %152 = sbr.rel (%p149) target = $region12
      $region11: #{tpu_custom_call.1} parent=5 // pred_region
        %s153 = ssub.s32 %s19, 1
        // Predicated region
        $region13: #{tpu_custom_call.1} parent=11 // pred_check
          %p154 = pneg %p92
        $region14: #{tpu_custom_call.1} parent=11 // pred_check_branch
          %156 = sbr.rel (%p154) target = $region16
        $region15: #{tpu_custom_call.1} parent=11 // pred_region
          _
        $region16: #{tpu_custom_call.1} parent=11 // pred_fallthru
          _
        // Predicated region
        $region17: #{tpu_custom_call.1} parent=11 // pred_check
          %p157 = pneg %p113
        $region18: #{tpu_custom_call.1} parent=11 // pred_check_branch
          %159 = sbr.rel (%p157) target = $region20
        $region19: #{tpu_custom_call.1} parent=11 // pred_region
          _
        $region20: #{tpu_custom_call.1} parent=11 // pred_fallthru
          _
      $region12: #{tpu_custom_call.1} parent=5 // pred_fallthru
        _
      %p160 = scmp.lt.s32.totalorder %s19, 2
      // Predicated region
      $region21: #{tpu_custom_call.1} parent=5 // pred_check
        %p161 = pneg %p160
      $region22: #{tpu_custom_call.1} parent=5 // pred_check_branch
        %163 = sbr.rel (%p161) target = $region24
      $region23: #{tpu_custom_call.1} parent=5 // pred_region
        // Predicated region
        $region25: #{tpu_custom_call.1} parent=23 // pred_check
          %p164 = pneg %p39
        $region26: #{tpu_custom_call.1} parent=23 // pred_check_branch
          %166 = sbr.rel (%p164) target = $region28
        $region27: #{tpu_custom_call.1} parent=23 // pred_region
          %s167 = sand.u32 %s29, 1
          %s168 = scalar_lea.sflag [#allocation3], %s167
          %s169 = sand.u32 %s29, 1
          %s170 = smul.addr %s169, 64
          %s171 = scalar_lea.vmem [#allocation2], %s170
          %s172 = smul.u32 4, %s19
          %s174 = ssub.s32 1024, 1024
          %175 = vsyncadd %s168, %s174
          %s176 = smul.addr %s172, 2
          %s177 = smul.addr %s176, 128
          %s178 = scalar_lea.hbm %s0, %s177
          %s179 = sshll.u32 %s171, 4
          %s180 = int_to_ptr.vmem [resolvable:$true] %s179
          %185 = dma.hbm_to_vmem [thread:$0]  %s178, 1024, %s180, %s168, 128, 128, 8
        $region28: #{tpu_custom_call.1} parent=23 // pred_fallthru
          _
        // Predicated region
        $region29: #{tpu_custom_call.1} parent=23 // pred_check
          %p186 = pneg %p65
        $region30: #{tpu_custom_call.1} parent=23 // pred_check_branch
          %188 = sbr.rel (%p186) target = $region32
        $region31: #{tpu_custom_call.1} parent=23 // pred_region
          %s189 = sand.u32 %s55, 1
          %s190 = scalar_lea.sflag [#allocation6], %s189
          %s191 = sand.u32 %s55, 1
          %s192 = smul.addr %s191, 64
          %s193 = scalar_lea.vmem [#allocation5], %s192
          %s194 = smul.u32 4, %s19
          %s196 = ssub.s32 1024, 1024
          %197 = vsyncadd %s190, %s196
          %s198 = smul.addr %s194, 2
          %s199 = smul.addr %s198, 128
          %s200 = scalar_lea.hbm %s1, %s199
          %s201 = sshll.u32 %s193, 4
          %s202 = int_to_ptr.vmem [resolvable:$true] %s201
          %207 = dma.hbm_to_vmem [thread:$0]  %s200, 1024, %s202, %s190, 128, 128, 8
        $region32: #{tpu_custom_call.1} parent=23 // pred_fallthru
          _
      $region24: #{tpu_custom_call.1} parent=5 // pred_fallthru
        _
      %p208 = scmp.le.s32.totalorder 1, %s19
      %p209 = scmp.lt.s32.totalorder %s19, 3
      %p210 = pnand %p208, %p209
      %p211 = pneg %p210
      // Predicated region
      $region33: #{tpu_custom_call.1} parent=5 // pred_check
        _
      $region34: #{tpu_custom_call.1} parent=5 // pred_check_branch
        %213 = sbr.rel (%p210) target = $region36
      $region35: #{tpu_custom_call.1} parent=5 // pred_region
        %s214 = ssub.s32 %s19, 1
        %s215 = sand.u32 %s32, 1
        %s216 = scalar_lea.sflag [#allocation3], %s215
        %s217 = sand.u32 %s32, 1
        %s218 = smul.addr %s217, 64
        %s219 = scalar_lea.vmem [#allocation2], %s218
        // Predicated region
        $region37: #{tpu_custom_call.1} parent=35 // pred_check
          %p220 = pneg %p45
        $region38: #{tpu_custom_call.1} parent=35 // pred_check_branch
          %222 = sbr.rel (%p220) target = $region40
        $region39: #{tpu_custom_call.1} parent=35 // pred_region
          %223 = dma.done %s216, 1024
        $region40: #{tpu_custom_call.1} parent=35 // pred_fallthru
          _
        %s224 = sand.u32 %s58, 1
        %s225 = scalar_lea.sflag [#allocation6], %s224
        %s226 = sand.u32 %s58, 1
        %s227 = smul.addr %s226, 64
        %s228 = scalar_lea.vmem [#allocation5], %s227
        // Predicated region
        $region41: #{tpu_custom_call.1} parent=35 // pred_check
          %p229 = pneg %p71
        $region42: #{tpu_custom_call.1} parent=35 // pred_check_branch
          %231 = sbr.rel (%p229) target = $region44
        $region43: #{tpu_custom_call.1} parent=35 // pred_region
          %232 = dma.done %s225, 1024
        $region44: #{tpu_custom_call.1} parent=35 // pred_fallthru
          _
        %s233 = sand.u32 %s32, 1
        %s234 = scalar_lea.sflag [#allocation3], %s233
        %s235 = sand.u32 %s32, 1
        %s236 = smul.addr %s235, 64
        %s237 = scalar_lea.vmem [#allocation2], %s236
        %p238 = pneg %p45
        %p239 = pneg %p42
        %s240 = sand.u32 %s58, 1
        %s241 = scalar_lea.sflag [#allocation6], %s240
        %s242 = sand.u32 %s58, 1
        %s243 = smul.addr %s242, 64
        %s244 = scalar_lea.vmem [#allocation5], %s243
        %p245 = pneg %p71
        %p246 = pneg %p68
        %p247 = pneg %p92
        %p248 = pneg %p89
        %p249 = pneg %p113
        %p250 = pneg %p110
        %p251 = pneg %p139
        %p252 = pneg %p136
        %s253 = sand.u32 %s126, 1
        %s254 = scalar_lea.sflag [#allocation4], %s253
        %s255 = sand.u32 %s126, 1
        %s256 = smul.addr %s255, 64
        %s257 = scalar_lea.vmem [#allocation7], %s256
        %s258 = smul.u32 4, %s24
        %s259 = smul.u32 4, %s24
        %s260 = smul.u32 4, %s24
        %v261 = vld [vmem:[%s219] sm:$0xff]
        %v262 = vld [vmem:[%s219 + $0x8] sm:$0xff]
        %v263 = vld [vmem:[%s219 + $0x10] sm:$0xff]
        %v264 = vld [vmem:[%s219 + $0x18] sm:$0xff]
        %v265 = vld [vmem:[%s219 + $0x20] sm:$0xff]
        %v266 = vld [vmem:[%s219 + $0x28] sm:$0xff]
        %v267 = vld [vmem:[%s219 + $0x30] sm:$0xff]
        %v268 = vld [vmem:[%s219 + $0x38] sm:$0xff]
        %v269 = vld [vmem:[%s228] sm:$0xff]
        %v270 = vld [vmem:[%s228 + $0x8] sm:$0xff]
        %v271 = vld [vmem:[%s228 + $0x10] sm:$0xff]
        %v272 = vld [vmem:[%s228 + $0x18] sm:$0xff]
        %v273 = vld [vmem:[%s228 + $0x20] sm:$0xff]
        %v274 = vld [vmem:[%s228 + $0x28] sm:$0xff]
        %v275 = vld [vmem:[%s228 + $0x30] sm:$0xff]
        %v276 = vld [vmem:[%s228 + $0x38] sm:$0xff]
        %v277 = vld [vmem:[%s2] sm:$0xff]
        %v278 = vld [vmem:[%s2 + $0x8] sm:$0xff]
        %v279 = vld [vmem:[%s3] sm:$0x1]
        %281 = vset.pattern.permute.xlu0 0
        %282 = vperm.xlu0 %281, %v277
        %v283 = vpop.permute.xlu0 %282
        %286 = vset.pattern.permute.xlu0 0
        %287 = vperm.xlu0 %286, %v278
        %v288 = vpop.permute.xlu0 %287
        %v291 = vlaneseq
        %v292 = vshrl.u32 %v291, 7
        %v293 = vsub.s32 0, %v292
        %v294 = vrot.slane %v279, %v293
        %v296 = vmul.f32 %v283, %v294
        %v297 = vmul.f32 %v288, %v294
        %v298 = vmul.f32 %v261, %v269
        %v299 = vmul.f32 %v262, %v270
        %v300 = vmul.f32 %v263, %v271
        %v301 = vmul.f32 %v264, %v272
        %v302 = vmul.f32 %v265, %v273
        %v303 = vmul.f32 %v266, %v274
        %v304 = vmul.f32 %v267, %v275
        %v305 = vmul.f32 %v268, %v276
        %v306 = vmul.f32 %v261, %v261
        %v307 = vmul.f32 %v262, %v262
        %v308 = vmul.f32 %v263, %v263
        %v309 = vmul.f32 %v264, %v264
        %v310 = vmul.f32 %v265, %v265
        %v311 = vmul.f32 %v266, %v266
        %v312 = vmul.f32 %v267, %v267
        %v313 = vmul.f32 %v268, %v268
        %vm346 = vcmask 1041408
        %v347 = vrot.slane %v261, 6
        %v348 = vrot.slane %v262, 6
        %v349 = vsel %vm346, %v347, %v348
        %v350 = vrot.slane %v263, 6
        %v351 = vrot.slane %v264, 6
        %v352 = vsel %vm346, %v350, %v351
        %v353 = vrot.slane %v265, 6
        %v354 = vrot.slane %v266, 6
        %v355 = vsel %vm346, %v353, %v354
        %v356 = vrot.slane %v267, 6
        %v357 = vrot.slane %v268, 6
        %v358 = vsel %vm346, %v356, %v357
        %v359 = vrot.slane %v269, 6
        %v360 = vrot.slane %v270, 6
        %v361 = vsel %vm346, %v359, %v360
        %v362 = vrot.slane %v271, 6
        %v363 = vrot.slane %v272, 6
        %v364 = vsel %vm346, %v362, %v363
        %v365 = vrot.slane %v273, 6
        %v366 = vrot.slane %v274, 6
        %v367 = vsel %vm346, %v365, %v366
        %v368 = vrot.slane %v275, 6
        %v369 = vrot.slane %v276, 6
        %v370 = vsel %vm346, %v368, %v369
        %v371 = vrot.slane %v298, 6
        %v372 = vrot.slane %v299, 6
        %v373 = vsel %vm346, %v371, %v372
        %v374 = vrot.slane %v300, 6
        %v375 = vrot.slane %v301, 6
        %v376 = vsel %vm346, %v374, %v375
        %v377 = vrot.slane %v302, 6
        %v378 = vrot.slane %v303, 6
        %v379 = vsel %vm346, %v377, %v378
        %v380 = vrot.slane %v304, 6
        %v381 = vrot.slane %v305, 6
        %v382 = vsel %vm346, %v380, %v381
        %v383 = vrot.slane %v306, 6
        %v384 = vrot.slane %v307, 6
        %v385 = vsel %vm346, %v383, %v384
        %v386 = vrot.slane %v308, 6
        %v387 = vrot.slane %v309, 6
        %v388 = vsel %vm346, %v386, %v387
        %v389 = vrot.slane %v310, 6
        %v390 = vrot.slane %v311, 6
        %v391 = vsel %vm346, %v389, %v390
        %v392 = vrot.slane %v312, 6
        %v393 = vrot.slane %v313, 6
        %v394 = vsel %vm346, %v392, %v393
        %v443 = vsel %vm346, 0.0, %v347
        %v444 = vsel %vm346, 0.0, %v350
        %v445 = vsel %vm346, 0.0, %v353
        %v446 = vsel %vm346, 0.0, %v356
        %v447 = vsel %vm346, 0.0, %v359
        %v448 = vsel %vm346, 0.0, %v362
        %v449 = vsel %vm346, 0.0, %v365
        %v450 = vsel %vm346, 0.0, %v368
        %v451 = vsel %vm346, 0.0, %v371
        %v452 = vsel %vm346, 0.0, %v374
        %v453 = vsel %vm346, 0.0, %v377
        %v454 = vsel %vm346, 0.0, %v380
        %v455 = vsel %vm346, 0.0, %v383
        %v456 = vsel %vm346, 0.0, %v386
        %v457 = vsel %vm346, 0.0, %v389
        %v458 = vsel %vm346, 0.0, %v392
        %v459 = vsel %vm346, %v348, 0.0
        %v460 = vsel %vm346, %v351, 0.0
        %v461 = vsel %vm346, %v354, 0.0
        %v462 = vsel %vm346, %v357, 0.0
        %v463 = vsel %vm346, %v360, 0.0
        %v464 = vsel %vm346, %v363, 0.0
        %v465 = vsel %vm346, %v366, 0.0
        %v466 = vsel %vm346, %v369, 0.0
        %v467 = vsel %vm346, %v372, 0.0
        %v468 = vsel %vm346, %v375, 0.0
        %v469 = vsel %vm346, %v378, 0.0
        %v470 = vsel %vm346, %v381, 0.0
        %v471 = vsel %vm346, %v384, 0.0
        %v472 = vsel %vm346, %v387, 0.0
        %v473 = vsel %vm346, %v390, 0.0
        %v474 = vsel %vm346, %v393, 0.0
        %vm507 = vcmask 1046528
        %v508 = vrot.slane %v443, 1
        %v509 = vrot.slane %v349, 1
        %v510 = vsel %vm507, %v508, %v509
        %v511 = vrot.slane %v459, 1
        %v512 = vsel %vm507, %v509, %v511
        %v513 = vrot.slane %v444, 1
        %v514 = vrot.slane %v352, 1
        %v515 = vsel %vm507, %v513, %v514
        %v516 = vrot.slane %v460, 1
        %v517 = vsel %vm507, %v514, %v516
        %v518 = vrot.slane %v445, 1
        %v519 = vrot.slane %v355, 1
        %v520 = vsel %vm507, %v518, %v519
        %v521 = vrot.slane %v461, 1
        %v522 = vsel %vm507, %v519, %v521
        %v523 = vrot.slane %v446, 1
        %v524 = vrot.slane %v358, 1
        %v525 = vsel %vm507, %v523, %v524
        %v526 = vrot.slane %v462, 1
        %v527 = vsel %vm507, %v524, %v526
        %v528 = vrot.slane %v447, 1
        %v529 = vrot.slane %v361, 1
        %v530 = vsel %vm507, %v528, %v529
        %v531 = vrot.slane %v463, 1
        %v532 = vsel %vm507, %v529, %v531
        %v533 = vrot.slane %v448, 1
        %v534 = vrot.slane %v364, 1
        %v535 = vsel %vm507, %v533, %v534
        %v536 = vrot.slane %v464, 1
        %v537 = vsel %vm507, %v534, %v536
        %v538 = vrot.slane %v449, 1
        %v539 = vrot.slane %v367, 1
        %v540 = vsel %vm507, %v538, %v539
        %v541 = vrot.slane %v465, 1
        %v542 = vsel %vm507, %v539, %v541
        %v543 = vrot.slane %v450, 1
        %v544 = vrot.slane %v370, 1
        %v545 = vsel %vm507, %v543, %v544
        %v546 = vrot.slane %v466, 1
        %v547 = vsel %vm507, %v544, %v546
        %v548 = vrot.slane %v451, 1
        %v549 = vrot.slane %v373, 1
        %v550 = vsel %vm507, %v548, %v549
        %v551 = vrot.slane %v467, 1
        %v552 = vsel %vm507, %v549, %v551
        %v553 = vrot.slane %v452, 1
        %v554 = vrot.slane %v376, 1
        %v555 = vsel %vm507, %v553, %v554
        %v556 = vrot.slane %v468, 1
        %v557 = vsel %vm507, %v554, %v556
        %v558 = vrot.slane %v453, 1
        %v559 = vrot.slane %v379, 1
        %v560 = vsel %vm507, %v558, %v559
        %v561 = vrot.slane %v469, 1
        %v562 = vsel %vm507, %v559, %v561
        %v563 = vrot.slane %v454, 1
        %v564 = vrot.slane %v382, 1
        %v565 = vsel %vm507, %v563, %v564
        %v566 = vrot.slane %v470, 1
        %v567 = vsel %vm507, %v564, %v566
        %v568 = vrot.slane %v455, 1
        %v569 = vrot.slane %v385, 1
        %v570 = vsel %vm507, %v568, %v569
        %v571 = vrot.slane %v471, 1
        %v572 = vsel %vm507, %v569, %v571
        %v573 = vrot.slane %v456, 1
        %v574 = vrot.slane %v388, 1
        %v575 = vsel %vm507, %v573, %v574
        %v576 = vrot.slane %v472, 1
        %v577 = vsel %vm507, %v574, %v576
        %v578 = vrot.slane %v457, 1
        %v579 = vrot.slane %v391, 1
        %v580 = vsel %vm507, %v578, %v579
        %v581 = vrot.slane %v473, 1
        %v582 = vsel %vm507, %v579, %v581
        %v583 = vrot.slane %v458, 1
        %v584 = vrot.slane %v394, 1
        %v585 = vsel %vm507, %v583, %v584
        %v586 = vrot.slane %v474, 1
        %v587 = vsel %vm507, %v584, %v586
        %v620 = vadd.f32 %v443, %v510
        %v621 = vadd.f32 %v349, %v512
        %v622 = vadd.f32 %v444, %v515
        %v623 = vadd.f32 %v352, %v517
        %v624 = vadd.f32 %v445, %v520
        %v625 = vadd.f32 %v355, %v522
        %v626 = vadd.f32 %v446, %v525
        %v627 = vadd.f32 %v358, %v527
        %v628 = vadd.f32 %v447, %v530
        %v629 = vadd.f32 %v361, %v532
        %v630 = vadd.f32 %v448, %v535
        %v631 = vadd.f32 %v364, %v537
        %v632 = vadd.f32 %v449, %v540
        %v633 = vadd.f32 %v367, %v542
        %v634 = vadd.f32 %v450, %v545
        %v635 = vadd.f32 %v370, %v547
        %v636 = vadd.f32 %v451, %v550
        %v637 = vadd.f32 %v373, %v552
        %v638 = vadd.f32 %v452, %v555
        %v639 = vadd.f32 %v376, %v557
        %v640 = vadd.f32 %v453, %v560
        %v641 = vadd.f32 %v379, %v562
        %v642 = vadd.f32 %v454, %v565
        %v643 = vadd.f32 %v382, %v567
        %v644 = vadd.f32 %v455, %v570
        %v645 = vadd.f32 %v385, %v572
        %v646 = vadd.f32 %v456, %v575
        %v647 = vadd.f32 %v388, %v577
        %v648 = vadd.f32 %v457, %v580
        %v649 = vadd.f32 %v391, %v582
        %v650 = vadd.f32 %v458, %v585
        %v651 = vadd.f32 %v394, %v587
        %vm652 = vcmask 1045504
        %v653 = vrot.slane %v443, 2
        %v654 = vrot.slane %v349, 2
        %v655 = vsel %vm652, %v653, %v654
        %v656 = vrot.slane %v459, 2
        %v657 = vsel %vm652, %v654, %v656
        %v658 = vrot.slane %v444, 2
        %v659 = vrot.slane %v352, 2
        %v660 = vsel %vm652, %v658, %v659
        %v661 = vrot.slane %v460, 2
        %v662 = vsel %vm652, %v659, %v661
        %v663 = vrot.slane %v445, 2
        %v664 = vrot.slane %v355, 2
        %v665 = vsel %vm652, %v663, %v664
        %v666 = vrot.slane %v461, 2
        %v667 = vsel %vm652, %v664, %v666
        %v668 = vrot.slane %v446, 2
        %v669 = vrot.slane %v358, 2
        %v670 = vsel %vm652, %v668, %v669
        %v671 = vrot.slane %v462, 2
        %v672 = vsel %vm652, %v669, %v671
        %v673 = vrot.slane %v447, 2
        %v674 = vrot.slane %v361, 2
        %v675 = vsel %vm652, %v673, %v674
        %v676 = vrot.slane %v463, 2
        %v677 = vsel %vm652, %v674, %v676
        %v678 = vrot.slane %v448, 2
        %v679 = vrot.slane %v364, 2
        %v680 = vsel %vm652, %v678, %v679
        %v681 = vrot.slane %v464, 2
        %v682 = vsel %vm652, %v679, %v681
        %v683 = vrot.slane %v449, 2
        %v684 = vrot.slane %v367, 2
        %v685 = vsel %vm652, %v683, %v684
        %v686 = vrot.slane %v465, 2
        %v687 = vsel %vm652, %v684, %v686
        %v688 = vrot.slane %v450, 2
        %v689 = vrot.slane %v370, 2
        %v690 = vsel %vm652, %v688, %v689
        %v691 = vrot.slane %v466, 2
        %v692 = vsel %vm652, %v689, %v691
        %v693 = vrot.slane %v451, 2
        %v694 = vrot.slane %v373, 2
        %v695 = vsel %vm652, %v693, %v694
        %v696 = vrot.slane %v467, 2
        %v697 = vsel %vm652, %v694, %v696
        %v698 = vrot.slane %v452, 2
        %v699 = vrot.slane %v376, 2
        %v700 = vsel %vm652, %v698, %v699
        %v701 = vrot.slane %v468, 2
        %v702 = vsel %vm652, %v699, %v701
        %v703 = vrot.slane %v453, 2
        %v704 = vrot.slane %v379, 2
        %v705 = vsel %vm652, %v703, %v704
        %v706 = vrot.slane %v469, 2
        %v707 = vsel %vm652, %v704, %v706
        %v708 = vrot.slane %v454, 2
        %v709 = vrot.slane %v382, 2
        %v710 = vsel %vm652, %v708, %v709
        %v711 = vrot.slane %v470, 2
        %v712 = vsel %vm652, %v709, %v711
        %v713 = vrot.slane %v455, 2
        %v714 = vrot.slane %v385, 2
        %v715 = vsel %vm652, %v713, %v714
        %v716 = vrot.slane %v471, 2
        %v717 = vsel %vm652, %v714, %v716
        %v718 = vrot.slane %v456, 2
        %v719 = vrot.slane %v388, 2
        %v720 = vsel %vm652, %v718, %v719
        %v721 = vrot.slane %v472, 2
        %v722 = vsel %vm652, %v719, %v721
        %v723 = vrot.slane %v457, 2
        %v724 = vrot.slane %v391, 2
        %v725 = vsel %vm652, %v723, %v724
        %v726 = vrot.slane %v473, 2
        %v727 = vsel %vm652, %v724, %v726
        %v728 = vrot.slane %v458, 2
        %v729 = vrot.slane %v394, 2
        %v730 = vsel %vm652, %v728, %v729
        %v731 = vrot.slane %v474, 2
        %v732 = vsel %vm652, %v729, %v731
        %v765 = vadd.f32 %v620, %v655
        %v766 = vadd.f32 %v621, %v657
        %v767 = vadd.f32 %v622, %v660
        %v768 = vadd.f32 %v623, %v662
        %v769 = vadd.f32 %v624, %v665
        %v770 = vadd.f32 %v625, %v667
        %v771 = vadd.f32 %v626, %v670
        %v772 = vadd.f32 %v627, %v672
        %v773 = vadd.f32 %v628, %v675
        %v774 = vadd.f32 %v629, %v677
        %v775 = vadd.f32 %v630, %v680
        %v776 = vadd.f32 %v631, %v682
        %v777 = vadd.f32 %v632, %v685
        %v778 = vadd.f32 %v633, %v687
        %v779 = vadd.f32 %v634, %v690
        %v780 = vadd.f32 %v635, %v692
        %v781 = vadd.f32 %v636, %v695
        %v782 = vadd.f32 %v637, %v697
        %v783 = vadd.f32 %v638, %v700
        %v784 = vadd.f32 %v639, %v702
        %v785 = vadd.f32 %v640, %v705
        %v786 = vadd.f32 %v641, %v707
        %v787 = vadd.f32 %v642, %v710
        %v788 = vadd.f32 %v643, %v712
        %v789 = vadd.f32 %v644, %v715
        %v790 = vadd.f32 %v645, %v717
        %v791 = vadd.f32 %v646, %v720
        %v792 = vadd.f32 %v647, %v722
        %v793 = vadd.f32 %v648, %v725
        %v794 = vadd.f32 %v649, %v727
        %v795 = vadd.f32 %v650, %v730
        %v796 = vadd.f32 %v651, %v732
        %vm797 = vcmask 1044480
        %v798 = vrot.slane %v443, 3
        %v799 = vrot.slane %v349, 3
        %v800 = vsel %vm797, %v798, %v799
        %v801 = vrot.slane %v459, 3
        %v802 = vsel %vm797, %v799, %v801
        %v803 = vrot.slane %v444, 3
        %v804 = vrot.slane %v352, 3
        %v805 = vsel %vm797, %v803, %v804
        %v806 = vrot.slane %v460, 3
        %v807 = vsel %vm797, %v804, %v806
        %v808 = vrot.slane %v445, 3
        %v809 = vrot.slane %v355, 3
        %v810 = vsel %vm797, %v808, %v809
        %v811 = vrot.slane %v461, 3
        %v812 = vsel %vm797, %v809, %v811
        %v813 = vrot.slane %v446, 3
        %v814 = vrot.slane %v358, 3
        %v815 = vsel %vm797, %v813, %v814
        %v816 = vrot.slane %v462, 3
        %v817 = vsel %vm797, %v814, %v816
        %v818 = vrot.slane %v447, 3
        %v819 = vrot.slane %v361, 3
        %v820 = vsel %vm797, %v818, %v819
        %v821 = vrot.slane %v463, 3
        %v822 = vsel %vm797, %v819, %v821
        %v823 = vrot.slane %v448, 3
        %v824 = vrot.slane %v364, 3
        %v825 = vsel %vm797, %v823, %v824
        %v826 = vrot.slane %v464, 3
        %v827 = vsel %vm797, %v824, %v826
        %v828 = vrot.slane %v449, 3
        %v829 = vrot.slane %v367, 3
        %v830 = vsel %vm797, %v828, %v829
        %v831 = vrot.slane %v465, 3
        %v832 = vsel %vm797, %v829, %v831
        %v833 = vrot.slane %v450, 3
        %v834 = vrot.slane %v370, 3
        %v835 = vsel %vm797, %v833, %v834
        %v836 = vrot.slane %v466, 3
        %v837 = vsel %vm797, %v834, %v836
        %v838 = vrot.slane %v451, 3
        %v839 = vrot.slane %v373, 3
        %v840 = vsel %vm797, %v838, %v839
        %v841 = vrot.slane %v467, 3
        %v842 = vsel %vm797, %v839, %v841
        %v843 = vrot.slane %v452, 3
        %v844 = vrot.slane %v376, 3
        %v845 = vsel %vm797, %v843, %v844
        %v846 = vrot.slane %v468, 3
        %v847 = vsel %vm797, %v844, %v846
        %v848 = vrot.slane %v453, 3
        %v849 = vrot.slane %v379, 3
        %v850 = vsel %vm797, %v848, %v849
        %v851 = vrot.slane %v469, 3
        %v852 = vsel %vm797, %v849, %v851
        %v853 = vrot.slane %v454, 3
        %v854 = vrot.slane %v382, 3
        %v855 = vsel %vm797, %v853, %v854
        %v856 = vrot.slane %v470, 3
        %v857 = vsel %vm797, %v854, %v856
        %v858 = vrot.slane %v455, 3
        %v859 = vrot.slane %v385, 3
        %v860 = vsel %vm797, %v858, %v859
        %v861 = vrot.slane %v471, 3
        %v862 = vsel %vm797, %v859, %v861
        %v863 = vrot.slane %v456, 3
        %v864 = vrot.slane %v388, 3
        %v865 = vsel %vm797, %v863, %v864
        %v866 = vrot.slane %v472, 3
        %v867 = vsel %vm797, %v864, %v866
        %v868 = vrot.slane %v457, 3
        %v869 = vrot.slane %v391, 3
        %v870 = vsel %vm797, %v868, %v869
        %v871 = vrot.slane %v473, 3
        %v872 = vsel %vm797, %v869, %v871
        %v873 = vrot.slane %v458, 3
        %v874 = vrot.slane %v394, 3
        %v875 = vsel %vm797, %v873, %v874
        %v876 = vrot.slane %v474, 3
        %v877 = vsel %vm797, %v874, %v876
        %v910 = vadd.f32 %v765, %v800
        %v911 = vadd.f32 %v766, %v802
        %v912 = vadd.f32 %v767, %v805
        %v913 = vadd.f32 %v768, %v807
        %v914 = vadd.f32 %v769, %v810
        %v915 = vadd.f32 %v770, %v812
        %v916 = vadd.f32 %v771, %v815
        %v917 = vadd.f32 %v772, %v817
        %v918 = vadd.f32 %v773, %v820
        %v919 = vadd.f32 %v774, %v822
        %v920 = vadd.f32 %v775, %v825
        %v921 = vadd.f32 %v776, %v827
        %v922 = vadd.f32 %v777, %v830
        %v923 = vadd.f32 %v778, %v832
        %v924 = vadd.f32 %v779, %v835
        %v925 = vadd.f32 %v780, %v837
        %v926 = vadd.f32 %v781, %v840
        %v927 = vadd.f32 %v782, %v842
        %v928 = vadd.f32 %v783, %v845
        %v929 = vadd.f32 %v784, %v847
        %v930 = vadd.f32 %v785, %v850
        %v931 = vadd.f32 %v786, %v852
        %v932 = vadd.f32 %v787, %v855
        %v933 = vadd.f32 %v788, %v857
        %v934 = vadd.f32 %v789, %v860
        %v935 = vadd.f32 %v790, %v862
        %v936 = vadd.f32 %v791, %v865
        %v937 = vadd.f32 %v792, %v867
        %v938 = vadd.f32 %v793, %v870
        %v939 = vadd.f32 %v794, %v872
        %v940 = vadd.f32 %v795, %v875
        %v941 = vadd.f32 %v796, %v877
        %vm942 = vcmask 1043456
        %v943 = vrot.slane %v443, 4
        %v944 = vrot.slane %v349, 4
        %v945 = vsel %vm942, %v943, %v944
        %v946 = vrot.slane %v459, 4
        %v947 = vsel %vm942, %v944, %v946
        %v948 = vrot.slane %v444, 4
        %v949 = vrot.slane %v352, 4
        %v950 = vsel %vm942, %v948, %v949
        %v951 = vrot.slane %v460, 4
        %v952 = vsel %vm942, %v949, %v951
        %v953 = vrot.slane %v445, 4
        %v954 = vrot.slane %v355, 4
        %v955 = vsel %vm942, %v953, %v954
        %v956 = vrot.slane %v461, 4
        %v957 = vsel %vm942, %v954, %v956
        %v958 = vrot.slane %v446, 4
        %v959 = vrot.slane %v358, 4
        %v960 = vsel %vm942, %v958, %v959
        %v961 = vrot.slane %v462, 4
        %v962 = vsel %vm942, %v959, %v961
        %v963 = vrot.slane %v447, 4
        %v964 = vrot.slane %v361, 4
        %v965 = vsel %vm942, %v963, %v964
        %v966 = vrot.slane %v463, 4
        %v967 = vsel %vm942, %v964, %v966
        %v968 = vrot.slane %v448, 4
        %v969 = vrot.slane %v364, 4
        %v970 = vsel %vm942, %v968, %v969
        %v971 = vrot.slane %v464, 4
        %v972 = vsel %vm942, %v969, %v971
        %v973 = vrot.slane %v449, 4
        %v974 = vrot.slane %v367, 4
        %v975 = vsel %vm942, %v973, %v974
        %v976 = vrot.slane %v465, 4
        %v977 = vsel %vm942, %v974, %v976
        %v978 = vrot.slane %v450, 4
        %v979 = vrot.slane %v370, 4
        %v980 = vsel %vm942, %v978, %v979
        %v981 = vrot.slane %v466, 4
        %v982 = vsel %vm942, %v979, %v981
        %v983 = vrot.slane %v451, 4
        %v984 = vrot.slane %v373, 4
        %v985 = vsel %vm942, %v983, %v984
        %v986 = vrot.slane %v467, 4
        %v987 = vsel %vm942, %v984, %v986
        %v988 = vrot.slane %v452, 4
        %v989 = vrot.slane %v376, 4
        %v990 = vsel %vm942, %v988, %v989
        %v991 = vrot.slane %v468, 4
        %v992 = vsel %vm942, %v989, %v991
        %v993 = vrot.slane %v453, 4
        %v994 = vrot.slane %v379, 4
        %v995 = vsel %vm942, %v993, %v994
        %v996 = vrot.slane %v469, 4
        %v997 = vsel %vm942, %v994, %v996
        %v998 = vrot.slane %v454, 4
        %v999 = vrot.slane %v382, 4
        %v1000 = vsel %vm942, %v998, %v999
        %v1001 = vrot.slane %v470, 4
        %v1002 = vsel %vm942, %v999, %v1001
        %v1003 = vrot.slane %v455, 4
        %v1004 = vrot.slane %v385, 4
        %v1005 = vsel %vm942, %v1003, %v1004
        %v1006 = vrot.slane %v471, 4
        %v1007 = vsel %vm942, %v1004, %v1006
        %v1008 = vrot.slane %v456, 4
        %v1009 = vrot.slane %v388, 4
        %v1010 = vsel %vm942, %v1008, %v1009
        %v1011 = vrot.slane %v472, 4
        %v1012 = vsel %vm942, %v1009, %v1011
        %v1013 = vrot.slane %v457, 4
        %v1014 = vrot.slane %v391, 4
        %v1015 = vsel %vm942, %v1013, %v1014
        %v1016 = vrot.slane %v473, 4
        %v1017 = vsel %vm942, %v1014, %v1016
        %v1018 = vrot.slane %v458, 4
        %v1019 = vrot.slane %v394, 4
        %v1020 = vsel %vm942, %v1018, %v1019
        %v1021 = vrot.slane %v474, 4
        %v1022 = vsel %vm942, %v1019, %v1021
        %v1055 = vadd.f32 %v910, %v945
        %v1056 = vadd.f32 %v911, %v947
        %v1057 = vadd.f32 %v912, %v950
        %v1058 = vadd.f32 %v913, %v952
        %v1059 = vadd.f32 %v914, %v955
        %v1060 = vadd.f32 %v915, %v957
        %v1061 = vadd.f32 %v916, %v960
        %v1062 = vadd.f32 %v917, %v962
        %v1063 = vadd.f32 %v918, %v965
        %v1064 = vadd.f32 %v919, %v967
        %v1065 = vadd.f32 %v920, %v970
        %v1066 = vadd.f32 %v921, %v972
        %v1067 = vadd.f32 %v922, %v975
        %v1068 = vadd.f32 %v923, %v977
        %v1069 = vadd.f32 %v924, %v980
        %v1070 = vadd.f32 %v925, %v982
        %v1071 = vadd.f32 %v926, %v985
        %v1072 = vadd.f32 %v927, %v987
        %v1073 = vadd.f32 %v928, %v990
        %v1074 = vadd.f32 %v929, %v992
        %v1075 = vadd.f32 %v930, %v995
        %v1076 = vadd.f32 %v931, %v997
        %v1077 = vadd.f32 %v932, %v1000
        %v1078 = vadd.f32 %v933, %v1002
        %v1079 = vadd.f32 %v934, %v1005
        %v1080 = vadd.f32 %v935, %v1007
        %v1081 = vadd.f32 %v936, %v1010
        %v1082 = vadd.f32 %v937, %v1012
        %v1083 = vadd.f32 %v938, %v1015
        %v1084 = vadd.f32 %v939, %v1017
        %v1085 = vadd.f32 %v940, %v1020
        %v1086 = vadd.f32 %v941, %v1022
        %1119 = vrot.lane.b32.xlu0 %v1055, 2
        %v1120 = vpop.permute.xlu0 %1119
        %1121 = vrot.lane.b32.xlu0 %v1056, 2
        %v1122 = vpop.permute.xlu0 %1121
        %1123 = vrot.lane.b32.xlu0 %v1057, 2
        %v1124 = vpop.permute.xlu0 %1123
        %1125 = vrot.lane.b32.xlu0 %v1058, 2
        %v1126 = vpop.permute.xlu0 %1125
        %1127 = vrot.lane.b32.xlu0 %v1059, 2
        %v1128 = vpop.permute.xlu0 %1127
        %1129 = vrot.lane.b32.xlu0 %v1060, 2
        %v1130 = vpop.permute.xlu0 %1129
        %1131 = vrot.lane.b32.xlu0 %v1061, 2
        %v1132 = vpop.permute.xlu0 %1131
        %1133 = vrot.lane.b32.xlu0 %v1062, 2
        %v1134 = vpop.permute.xlu0 %1133
        %1135 = vrot.lane.b32.xlu0 %v1063, 2
        %v1136 = vpop.permute.xlu0 %1135
        %1137 = vrot.lane.b32.xlu0 %v1064, 2
        %v1138 = vpop.permute.xlu0 %1137
        %1139 = vrot.lane.b32.xlu0 %v1065, 2
        %v1140 = vpop.permute.xlu0 %1139
        %1141 = vrot.lane.b32.xlu0 %v1066, 2
        %v1142 = vpop.permute.xlu0 %1141
        %1143 = vrot.lane.b32.xlu0 %v1067, 2
        %v1144 = vpop.permute.xlu0 %1143
        %1145 = vrot.lane.b32.xlu0 %v1068, 2
        %v1146 = vpop.permute.xlu0 %1145
        %1147 = vrot.lane.b32.xlu0 %v1069, 2
        %v1148 = vpop.permute.xlu0 %1147
        %1149 = vrot.lane.b32.xlu0 %v1070, 2
        %v1150 = vpop.permute.xlu0 %1149
        %1151 = vrot.lane.b32.xlu0 %v1071, 2
        %v1152 = vpop.permute.xlu0 %1151
        %1153 = vrot.lane.b32.xlu0 %v1072, 2
        %v1154 = vpop.permute.xlu0 %1153
        %1155 = vrot.lane.b32.xlu0 %v1073, 2
        %v1156 = vpop.permute.xlu0 %1155
        %1157 = vrot.lane.b32.xlu0 %v1074, 2
        %v1158 = vpop.permute.xlu0 %1157
        %1159 = vrot.lane.b32.xlu0 %v1075, 2
        %v1160 = vpop.permute.xlu0 %1159
        %1161 = vrot.lane.b32.xlu0 %v1076, 2
        %v1162 = vpop.permute.xlu0 %1161
        %1163 = vrot.lane.b32.xlu0 %v1077, 2
        %v1164 = vpop.permute.xlu0 %1163
        %1165 = vrot.lane.b32.xlu0 %v1078, 2
        %v1166 = vpop.permute.xlu0 %1165
        %1167 = vrot.lane.b32.xlu0 %v1079, 2
        %v1168 = vpop.permute.xlu0 %1167
        %1169 = vrot.lane.b32.xlu0 %v1080, 2
        %v1170 = vpop.permute.xlu0 %1169
        %1171 = vrot.lane.b32.xlu0 %v1081, 2
        %v1172 = vpop.permute.xlu0 %1171
        %1173 = vrot.lane.b32.xlu0 %v1082, 2
        %v1174 = vpop.permute.xlu0 %1173
        %1175 = vrot.lane.b32.xlu0 %v1083, 2
        %v1176 = vpop.permute.xlu0 %1175
        %1177 = vrot.lane.b32.xlu0 %v1084, 2
        %v1178 = vpop.permute.xlu0 %1177
        %1179 = vrot.lane.b32.xlu0 %v1085, 2
        %v1180 = vpop.permute.xlu0 %1179
        %1181 = vrot.lane.b32.xlu0 %v1086, 2
        %v1182 = vpop.permute.xlu0 %1181
        %vm1215 = vcmask 15360
        %v1216 = vsel %vm1215, 0.0, %v1120
        %v1217 = vsel %vm1215, 0.0, %v1122
        %v1218 = vsel %vm1215, 0.0, %v1124
        %v1219 = vsel %vm1215, 0.0, %v1126
        %v1220 = vsel %vm1215, 0.0, %v1128
        %v1221 = vsel %vm1215, 0.0, %v1130
        %v1222 = vsel %vm1215, 0.0, %v1132
        %v1223 = vsel %vm1215, 0.0, %v1134
        %v1224 = vsel %vm1215, 0.0, %v1136
        %v1225 = vsel %vm1215, 0.0, %v1138
        %v1226 = vsel %vm1215, 0.0, %v1140
        %v1227 = vsel %vm1215, 0.0, %v1142
        %v1228 = vsel %vm1215, 0.0, %v1144
        %v1229 = vsel %vm1215, 0.0, %v1146
        %v1230 = vsel %vm1215, 0.0, %v1148
        %v1231 = vsel %vm1215, 0.0, %v1150
        %v1232 = vsel %vm1215, 0.0, %v1152
        %v1233 = vsel %vm1215, 0.0, %v1154
        %v1234 = vsel %vm1215, 0.0, %v1156
        %v1235 = vsel %vm1215, 0.0, %v1158
        %v1236 = vsel %vm1215, 0.0, %v1160
        %v1237 = vsel %vm1215, 0.0, %v1162
        %v1238 = vsel %vm1215, 0.0, %v1164
        %v1239 = vsel %vm1215, 0.0, %v1166
        %v1240 = vsel %vm1215, 0.0, %v1168
        %v1241 = vsel %vm1215, 0.0, %v1170
        %v1242 = vsel %vm1215, 0.0, %v1172
        %v1243 = vsel %vm1215, 0.0, %v1174
        %v1244 = vsel %vm1215, 0.0, %v1176
        %v1245 = vsel %vm1215, 0.0, %v1178
        %v1246 = vsel %vm1215, 0.0, %v1180
        %v1247 = vsel %vm1215, 0.0, %v1182
        %vm1248 = vcmask 146432
        %v1249 = vsel %vm1248, %v1216, 0.0
        %v1250 = vsel %vm1248, %v1217, 0.0
        %v1251 = vsel %vm1248, %v1218, 0.0
        %v1252 = vsel %vm1248, %v1219, 0.0
        %v1253 = vsel %vm1248, %v1220, 0.0
        %v1254 = vsel %vm1248, %v1221, 0.0
        %v1255 = vsel %vm1248, %v1222, 0.0
        %v1256 = vsel %vm1248, %v1223, 0.0
        %v1257 = vsel %vm1248, %v1224, 0.0
        %v1258 = vsel %vm1248, %v1225, 0.0
        %v1259 = vsel %vm1248, %v1226, 0.0
        %v1260 = vsel %vm1248, %v1227, 0.0
        %v1261 = vsel %vm1248, %v1228, 0.0
        %v1262 = vsel %vm1248, %v1229, 0.0
        %v1263 = vsel %vm1248, %v1230, 0.0
        %v1264 = vsel %vm1248, %v1231, 0.0
        %v1265 = vsel %vm1248, %v1232, 0.0
        %v1266 = vsel %vm1248, %v1233, 0.0
        %v1267 = vsel %vm1248, %v1234, 0.0
        %v1268 = vsel %vm1248, %v1235, 0.0
        %v1269 = vsel %vm1248, %v1236, 0.0
        %v1270 = vsel %vm1248, %v1237, 0.0
        %v1271 = vsel %vm1248, %v1238, 0.0
        %v1272 = vsel %vm1248, %v1239, 0.0
        %v1273 = vsel %vm1248, %v1240, 0.0
        %v1274 = vsel %vm1248, %v1241, 0.0
        %v1275 = vsel %vm1248, %v1242, 0.0
        %v1276 = vsel %vm1248, %v1243, 0.0
        %v1277 = vsel %vm1248, %v1244, 0.0
        %v1278 = vsel %vm1248, %v1245, 0.0
        %v1279 = vsel %vm1248, %v1246, 0.0
        %v1280 = vsel %vm1248, %v1247, 0.0
        %1313 = vrot.lane.b32.xlu0 %v1249, 127
        %v1314 = vpop.permute.xlu0 %1313
        %1315 = vrot.lane.b32.xlu0 %v1250, 127
        %v1316 = vpop.permute.xlu0 %1315
        %1317 = vrot.lane.b32.xlu0 %v1251, 127
        %v1318 = vpop.permute.xlu0 %1317
        %1319 = vrot.lane.b32.xlu0 %v1252, 127
        %v1320 = vpop.permute.xlu0 %1319
        %1321 = vrot.lane.b32.xlu0 %v1253, 127
        %v1322 = vpop.permute.xlu0 %1321
        %1323 = vrot.lane.b32.xlu0 %v1254, 127
        %v1324 = vpop.permute.xlu0 %1323
        %1325 = vrot.lane.b32.xlu0 %v1255, 127
        %v1326 = vpop.permute.xlu0 %1325
        %1327 = vrot.lane.b32.xlu0 %v1256, 127
        %v1328 = vpop.permute.xlu0 %1327
        %1329 = vrot.lane.b32.xlu0 %v1257, 127
        %v1330 = vpop.permute.xlu0 %1329
        %1331 = vrot.lane.b32.xlu0 %v1258, 127
        %v1332 = vpop.permute.xlu0 %1331
        %1333 = vrot.lane.b32.xlu0 %v1259, 127
        %v1334 = vpop.permute.xlu0 %1333
        %1335 = vrot.lane.b32.xlu0 %v1260, 127
        %v1336 = vpop.permute.xlu0 %1335
        %1337 = vrot.lane.b32.xlu0 %v1261, 127
        %v1338 = vpop.permute.xlu0 %1337
        %1339 = vrot.lane.b32.xlu0 %v1262, 127
        %v1340 = vpop.permute.xlu0 %1339
        %1341 = vrot.lane.b32.xlu0 %v1263, 127
        %v1342 = vpop.permute.xlu0 %1341
        %1343 = vrot.lane.b32.xlu0 %v1264, 127
        %v1344 = vpop.permute.xlu0 %1343
        %1345 = vrot.lane.b32.xlu0 %v1265, 127
        %v1346 = vpop.permute.xlu0 %1345
        %1347 = vrot.lane.b32.xlu0 %v1266, 127
        %v1348 = vpop.permute.xlu0 %1347
        %1349 = vrot.lane.b32.xlu0 %v1267, 127
        %v1350 = vpop.permute.xlu0 %1349
        %1351 = vrot.lane.b32.xlu0 %v1268, 127
        %v1352 = vpop.permute.xlu0 %1351
        %1353 = vrot.lane.b32.xlu0 %v1269, 127
        %v1354 = vpop.permute.xlu0 %1353
        %1355 = vrot.lane.b32.xlu0 %v1270, 127
        %v1356 = vpop.permute.xlu0 %1355
        %1357 = vrot.lane.b32.xlu0 %v1271, 127
        %v1358 = vpop.permute.xlu0 %1357
        %1359 = vrot.lane.b32.xlu0 %v1272, 127
        %v1360 = vpop.permute.xlu0 %1359
        %1361 = vrot.lane.b32.xlu0 %v1273, 127
        %v1362 = vpop.permute.xlu0 %1361
        %1363 = vrot.lane.b32.xlu0 %v1274, 127
        %v1364 = vpop.permute.xlu0 %1363
        %1365 = vrot.lane.b32.xlu0 %v1275, 127
        %v1366 = vpop.permute.xlu0 %1365
        %1367 = vrot.lane.b32.xlu0 %v1276, 127
        %v1368 = vpop.permute.xlu0 %1367
        %1369 = vrot.lane.b32.xlu0 %v1277, 127
        %v1370 = vpop.permute.xlu0 %1369
        %1371 = vrot.lane.b32.xlu0 %v1278, 127
        %v1372 = vpop.permute.xlu0 %1371
        %1373 = vrot.lane.b32.xlu0 %v1279, 127
        %v1374 = vpop.permute.xlu0 %1373
        %1375 = vrot.lane.b32.xlu0 %v1280, 127
        %v1376 = vpop.permute.xlu0 %1375
        %v1409 = vadd.f32 %v1249, %v1314
        %v1410 = vadd.f32 %v1250, %v1316
        %v1411 = vadd.f32 %v1251, %v1318
        %v1412 = vadd.f32 %v1252, %v1320
        %v1413 = vadd.f32 %v1253, %v1322
        %v1414 = vadd.f32 %v1254, %v1324
        %v1415 = vadd.f32 %v1255, %v1326
        %v1416 = vadd.f32 %v1256, %v1328
        %v1417 = vadd.f32 %v1257, %v1330
        %v1418 = vadd.f32 %v1258, %v1332
        %v1419 = vadd.f32 %v1259, %v1334
        %v1420 = vadd.f32 %v1260, %v1336
        %v1421 = vadd.f32 %v1261, %v1338
        %v1422 = vadd.f32 %v1262, %v1340
        %v1423 = vadd.f32 %v1263, %v1342
        %v1424 = vadd.f32 %v1264, %v1344
        %v1425 = vadd.f32 %v1265, %v1346
        %v1426 = vadd.f32 %v1266, %v1348
        %v1427 = vadd.f32 %v1267, %v1350
        %v1428 = vadd.f32 %v1268, %v1352
        %v1429 = vadd.f32 %v1269, %v1354
        %v1430 = vadd.f32 %v1270, %v1356
        %v1431 = vadd.f32 %v1271, %v1358
        %v1432 = vadd.f32 %v1272, %v1360
        %v1433 = vadd.f32 %v1273, %v1362
        %v1434 = vadd.f32 %v1274, %v1364
        %v1435 = vadd.f32 %v1275, %v1366
        %v1436 = vadd.f32 %v1276, %v1368
        %v1437 = vadd.f32 %v1277, %v1370
        %v1438 = vadd.f32 %v1278, %v1372
        %v1439 = vadd.f32 %v1279, %v1374
        %v1440 = vadd.f32 %v1280, %v1376
        %1441 = vrot.lane.b32.xlu0 %v1249, 126
        %v1442 = vpop.permute.xlu0 %1441
        %1443 = vrot.lane.b32.xlu0 %v1250, 126
        %v1444 = vpop.permute.xlu0 %1443
        %1445 = vrot.lane.b32.xlu0 %v1251, 126
        %v1446 = vpop.permute.xlu0 %1445
        %1447 = vrot.lane.b32.xlu0 %v1252, 126
        %v1448 = vpop.permute.xlu0 %1447
        %1449 = vrot.lane.b32.xlu0 %v1253, 126
        %v1450 = vpop.permute.xlu0 %1449
        %1451 = vrot.lane.b32.xlu0 %v1254, 126
        %v1452 = vpop.permute.xlu0 %1451
        %1453 = vrot.lane.b32.xlu0 %v1255, 126
        %v1454 = vpop.permute.xlu0 %1453
        %1455 = vrot.lane.b32.xlu0 %v1256, 126
        %v1456 = vpop.permute.xlu0 %1455
        %1457 = vrot.lane.b32.xlu0 %v1257, 126
        %v1458 = vpop.permute.xlu0 %1457
        %1459 = vrot.lane.b32.xlu0 %v1258, 126
        %v1460 = vpop.permute.xlu0 %1459
        %1461 = vrot.lane.b32.xlu0 %v1259, 126
        %v1462 = vpop.permute.xlu0 %1461
        %1463 = vrot.lane.b32.xlu0 %v1260, 126
        %v1464 = vpop.permute.xlu0 %1463
        %1465 = vrot.lane.b32.xlu0 %v1261, 126
        %v1466 = vpop.permute.xlu0 %1465
        %1467 = vrot.lane.b32.xlu0 %v1262, 126
        %v1468 = vpop.permute.xlu0 %1467
        %1469 = vrot.lane.b32.xlu0 %v1263, 126
        %v1470 = vpop.permute.xlu0 %1469
        %1471 = vrot.lane.b32.xlu0 %v1264, 126
        %v1472 = vpop.permute.xlu0 %1471
        %1473 = vrot.lane.b32.xlu0 %v1265, 126
        %v1474 = vpop.permute.xlu0 %1473
        %1475 = vrot.lane.b32.xlu0 %v1266, 126
        %v1476 = vpop.permute.xlu0 %1475
        %1477 = vrot.lane.b32.xlu0 %v1267, 126
        %v1478 = vpop.permute.xlu0 %1477
        %1479 = vrot.lane.b32.xlu0 %v1268, 126
        %v1480 = vpop.permute.xlu0 %1479
        %1481 = vrot.lane.b32.xlu0 %v1269, 126
        %v1482 = vpop.permute.xlu0 %1481
        %1483 = vrot.lane.b32.xlu0 %v1270, 126
        %v1484 = vpop.permute.xlu0 %1483
        %1485 = vrot.lane.b32.xlu0 %v1271, 126
        %v1486 = vpop.permute.xlu0 %1485
        %1487 = vrot.lane.b32.xlu0 %v1272, 126
        %v1488 = vpop.permute.xlu0 %1487
        %1489 = vrot.lane.b32.xlu0 %v1273, 126
        %v1490 = vpop.permute.xlu0 %1489
        %1491 = vrot.lane.b32.xlu0 %v1274, 126
        %v1492 = vpop.permute.xlu0 %1491
        %1493 = vrot.lane.b32.xlu0 %v1275, 126
        %v1494 = vpop.permute.xlu0 %1493
        %1495 = vrot.lane.b32.xlu0 %v1276, 126
        %v1496 = vpop.permute.xlu0 %1495
        %1497 = vrot.lane.b32.xlu0 %v1277, 126
        %v1498 = vpop.permute.xlu0 %1497
        %1499 = vrot.lane.b32.xlu0 %v1278, 126
        %v1500 = vpop.permute.xlu0 %1499
        %1501 = vrot.lane.b32.xlu0 %v1279, 126
        %v1502 = vpop.permute.xlu0 %1501
        %1503 = vrot.lane.b32.xlu0 %v1280, 126
        %v1504 = vpop.permute.xlu0 %1503
        %v1537 = vadd.f32 %v1409, %v1442
        %v1538 = vadd.f32 %v1410, %v1444
        %v1539 = vadd.f32 %v1411, %v1446
        %v1540 = vadd.f32 %v1412, %v1448
        %v1541 = vadd.f32 %v1413, %v1450
        %v1542 = vadd.f32 %v1414, %v1452
        %v1543 = vadd.f32 %v1415, %v1454
        %v1544 = vadd.f32 %v1416, %v1456
        %v1545 = vadd.f32 %v1417, %v1458
        %v1546 = vadd.f32 %v1418, %v1460
        %v1547 = vadd.f32 %v1419, %v1462
        %v1548 = vadd.f32 %v1420, %v1464
        %v1549 = vadd.f32 %v1421, %v1466
        %v1550 = vadd.f32 %v1422, %v1468
        %v1551 = vadd.f32 %v1423, %v1470
        %v1552 = vadd.f32 %v1424, %v1472
        %v1553 = vadd.f32 %v1425, %v1474
        %v1554 = vadd.f32 %v1426, %v1476
        %v1555 = vadd.f32 %v1427, %v1478
        %v1556 = vadd.f32 %v1428, %v1480
        %v1557 = vadd.f32 %v1429, %v1482
        %v1558 = vadd.f32 %v1430, %v1484
        %v1559 = vadd.f32 %v1431, %v1486
        %v1560 = vadd.f32 %v1432, %v1488
        %v1561 = vadd.f32 %v1433, %v1490
        %v1562 = vadd.f32 %v1434, %v1492
        %v1563 = vadd.f32 %v1435, %v1494
        %v1564 = vadd.f32 %v1436, %v1496
        %v1565 = vadd.f32 %v1437, %v1498
        %v1566 = vadd.f32 %v1438, %v1500
        %v1567 = vadd.f32 %v1439, %v1502
        %v1568 = vadd.f32 %v1440, %v1504
        %1569 = vrot.lane.b32.xlu0 %v1249, 125
        %v1570 = vpop.permute.xlu0 %1569
        %1571 = vrot.lane.b32.xlu0 %v1250, 125
        %v1572 = vpop.permute.xlu0 %1571
        %1573 = vrot.lane.b32.xlu0 %v1251, 125
        %v1574 = vpop.permute.xlu0 %1573
        %1575 = vrot.lane.b32.xlu0 %v1252, 125
        %v1576 = vpop.permute.xlu0 %1575
        %1577 = vrot.lane.b32.xlu0 %v1253, 125
        %v1578 = vpop.permute.xlu0 %1577
        %1579 = vrot.lane.b32.xlu0 %v1254, 125
        %v1580 = vpop.permute.xlu0 %1579
        %1581 = vrot.lane.b32.xlu0 %v1255, 125
        %v1582 = vpop.permute.xlu0 %1581
        %1583 = vrot.lane.b32.xlu0 %v1256, 125
        %v1584 = vpop.permute.xlu0 %1583
        %1585 = vrot.lane.b32.xlu0 %v1257, 125
        %v1586 = vpop.permute.xlu0 %1585
        %1587 = vrot.lane.b32.xlu0 %v1258, 125
        %v1588 = vpop.permute.xlu0 %1587
        %1589 = vrot.lane.b32.xlu0 %v1259, 125
        %v1590 = vpop.permute.xlu0 %1589
        %1591 = vrot.lane.b32.xlu0 %v1260, 125
        %v1592 = vpop.permute.xlu0 %1591
        %1593 = vrot.lane.b32.xlu0 %v1261, 125
        %v1594 = vpop.permute.xlu0 %1593
        %1595 = vrot.lane.b32.xlu0 %v1262, 125
        %v1596 = vpop.permute.xlu0 %1595
        %1597 = vrot.lane.b32.xlu0 %v1263, 125
        %v1598 = vpop.permute.xlu0 %1597
        %1599 = vrot.lane.b32.xlu0 %v1264, 125
        %v1600 = vpop.permute.xlu0 %1599
        %1601 = vrot.lane.b32.xlu0 %v1265, 125
        %v1602 = vpop.permute.xlu0 %1601
        %1603 = vrot.lane.b32.xlu0 %v1266, 125
        %v1604 = vpop.permute.xlu0 %1603
        %1605 = vrot.lane.b32.xlu0 %v1267, 125
        %v1606 = vpop.permute.xlu0 %1605
        %1607 = vrot.lane.b32.xlu0 %v1268, 125
        %v1608 = vpop.permute.xlu0 %1607
        %1609 = vrot.lane.b32.xlu0 %v1269, 125
        %v1610 = vpop.permute.xlu0 %1609
        %1611 = vrot.lane.b32.xlu0 %v1270, 125
        %v1612 = vpop.permute.xlu0 %1611
        %1613 = vrot.lane.b32.xlu0 %v1271, 125
        %v1614 = vpop.permute.xlu0 %1613
        %1615 = vrot.lane.b32.xlu0 %v1272, 125
        %v1616 = vpop.permute.xlu0 %1615
        %1617 = vrot.lane.b32.xlu0 %v1273, 125
        %v1618 = vpop.permute.xlu0 %1617
        %1619 = vrot.lane.b32.xlu0 %v1274, 125
        %v1620 = vpop.permute.xlu0 %1619
        %1621 = vrot.lane.b32.xlu0 %v1275, 125
        %v1622 = vpop.permute.xlu0 %1621
        %1623 = vrot.lane.b32.xlu0 %v1276, 125
        %v1624 = vpop.permute.xlu0 %1623
        %1625 = vrot.lane.b32.xlu0 %v1277, 125
        %v1626 = vpop.permute.xlu0 %1625
        %1627 = vrot.lane.b32.xlu0 %v1278, 125
        %v1628 = vpop.permute.xlu0 %1627
        %1629 = vrot.lane.b32.xlu0 %v1279, 125
        %v1630 = vpop.permute.xlu0 %1629
        %1631 = vrot.lane.b32.xlu0 %v1280, 125
        %v1632 = vpop.permute.xlu0 %1631
        %v1665 = vadd.f32 %v1537, %v1570
        %v1666 = vadd.f32 %v1538, %v1572
        %v1667 = vadd.f32 %v1539, %v1574
        %v1668 = vadd.f32 %v1540, %v1576
        %v1669 = vadd.f32 %v1541, %v1578
        %v1670 = vadd.f32 %v1542, %v1580
        %v1671 = vadd.f32 %v1543, %v1582
        %v1672 = vadd.f32 %v1544, %v1584
        %v1673 = vadd.f32 %v1545, %v1586
        %v1674 = vadd.f32 %v1546, %v1588
        %v1675 = vadd.f32 %v1547, %v1590
        %v1676 = vadd.f32 %v1548, %v1592
        %v1677 = vadd.f32 %v1549, %v1594
        %v1678 = vadd.f32 %v1550, %v1596
        %v1679 = vadd.f32 %v1551, %v1598
        %v1680 = vadd.f32 %v1552, %v1600
        %v1681 = vadd.f32 %v1553, %v1602
        %v1682 = vadd.f32 %v1554, %v1604
        %v1683 = vadd.f32 %v1555, %v1606
        %v1684 = vadd.f32 %v1556, %v1608
        %v1685 = vadd.f32 %v1557, %v1610
        %v1686 = vadd.f32 %v1558, %v1612
        %v1687 = vadd.f32 %v1559, %v1614
        %v1688 = vadd.f32 %v1560, %v1616
        %v1689 = vadd.f32 %v1561, %v1618
        %v1690 = vadd.f32 %v1562, %v1620
        %v1691 = vadd.f32 %v1563, %v1622
        %v1692 = vadd.f32 %v1564, %v1624
        %v1693 = vadd.f32 %v1565, %v1626
        %v1694 = vadd.f32 %v1566, %v1628
        %v1695 = vadd.f32 %v1567, %v1630
        %v1696 = vadd.f32 %v1568, %v1632
        %1697 = vrot.lane.b32.xlu0 %v1249, 124
        %v1698 = vpop.permute.xlu0 %1697
        %1699 = vrot.lane.b32.xlu0 %v1250, 124
        %v1700 = vpop.permute.xlu0 %1699
        %1701 = vrot.lane.b32.xlu0 %v1251, 124
        %v1702 = vpop.permute.xlu0 %1701
        %1703 = vrot.lane.b32.xlu0 %v1252, 124
        %v1704 = vpop.permute.xlu0 %1703
        %1705 = vrot.lane.b32.xlu0 %v1253, 124
        %v1706 = vpop.permute.xlu0 %1705
        %1707 = vrot.lane.b32.xlu0 %v1254, 124
        %v1708 = vpop.permute.xlu0 %1707
        %1709 = vrot.lane.b32.xlu0 %v1255, 124
        %v1710 = vpop.permute.xlu0 %1709
        %1711 = vrot.lane.b32.xlu0 %v1256, 124
        %v1712 = vpop.permute.xlu0 %1711
        %1713 = vrot.lane.b32.xlu0 %v1257, 124
        %v1714 = vpop.permute.xlu0 %1713
        %1715 = vrot.lane.b32.xlu0 %v1258, 124
        %v1716 = vpop.permute.xlu0 %1715
        %1717 = vrot.lane.b32.xlu0 %v1259, 124
        %v1718 = vpop.permute.xlu0 %1717
        %1719 = vrot.lane.b32.xlu0 %v1260, 124
        %v1720 = vpop.permute.xlu0 %1719
        %1721 = vrot.lane.b32.xlu0 %v1261, 124
        %v1722 = vpop.permute.xlu0 %1721
        %1723 = vrot.lane.b32.xlu0 %v1262, 124
        %v1724 = vpop.permute.xlu0 %1723
        %1725 = vrot.lane.b32.xlu0 %v1263, 124
        %v1726 = vpop.permute.xlu0 %1725
        %1727 = vrot.lane.b32.xlu0 %v1264, 124
        %v1728 = vpop.permute.xlu0 %1727
        %1729 = vrot.lane.b32.xlu0 %v1265, 124
        %v1730 = vpop.permute.xlu0 %1729
        %1731 = vrot.lane.b32.xlu0 %v1266, 124
        %v1732 = vpop.permute.xlu0 %1731
        %1733 = vrot.lane.b32.xlu0 %v1267, 124
        %v1734 = vpop.permute.xlu0 %1733
        %1735 = vrot.lane.b32.xlu0 %v1268, 124
        %v1736 = vpop.permute.xlu0 %1735
        %1737 = vrot.lane.b32.xlu0 %v1269, 124
        %v1738 = vpop.permute.xlu0 %1737
        %1739 = vrot.lane.b32.xlu0 %v1270, 124
        %v1740 = vpop.permute.xlu0 %1739
        %1741 = vrot.lane.b32.xlu0 %v1271, 124
        %v1742 = vpop.permute.xlu0 %1741
        %1743 = vrot.lane.b32.xlu0 %v1272, 124
        %v1744 = vpop.permute.xlu0 %1743
        %1745 = vrot.lane.b32.xlu0 %v1273, 124
        %v1746 = vpop.permute.xlu0 %1745
        %1747 = vrot.lane.b32.xlu0 %v1274, 124
        %v1748 = vpop.permute.xlu0 %1747
        %1749 = vrot.lane.b32.xlu0 %v1275, 124
        %v1750 = vpop.permute.xlu0 %1749
        %1751 = vrot.lane.b32.xlu0 %v1276, 124
        %v1752 = vpop.permute.xlu0 %1751
        %1753 = vrot.lane.b32.xlu0 %v1277, 124
        %v1754 = vpop.permute.xlu0 %1753
        %1755 = vrot.lane.b32.xlu0 %v1278, 124
        %v1756 = vpop.permute.xlu0 %1755
        %1757 = vrot.lane.b32.xlu0 %v1279, 124
        %v1758 = vpop.permute.xlu0 %1757
        %1759 = vrot.lane.b32.xlu0 %v1280, 124
        %v1760 = vpop.permute.xlu0 %1759
        %v1793 = vadd.f32 %v1665, %v1698
        %v1794 = vadd.f32 %v1666, %v1700
        %v1795 = vadd.f32 %v1667, %v1702
        %v1796 = vadd.f32 %v1668, %v1704
        %v1797 = vadd.f32 %v1669, %v1706
        %v1798 = vadd.f32 %v1670, %v1708
        %v1799 = vadd.f32 %v1671, %v1710
        %v1800 = vadd.f32 %v1672, %v1712
        %v1801 = vadd.f32 %v1673, %v1714
        %v1802 = vadd.f32 %v1674, %v1716
        %v1803 = vadd.f32 %v1675, %v1718
        %v1804 = vadd.f32 %v1676, %v1720
        %v1805 = vadd.f32 %v1677, %v1722
        %v1806 = vadd.f32 %v1678, %v1724
        %v1807 = vadd.f32 %v1679, %v1726
        %v1808 = vadd.f32 %v1680, %v1728
        %v1809 = vadd.f32 %v1681, %v1730
        %v1810 = vadd.f32 %v1682, %v1732
        %v1811 = vadd.f32 %v1683, %v1734
        %v1812 = vadd.f32 %v1684, %v1736
        %v1813 = vadd.f32 %v1685, %v1738
        %v1814 = vadd.f32 %v1686, %v1740
        %v1815 = vadd.f32 %v1687, %v1742
        %v1816 = vadd.f32 %v1688, %v1744
        %v1817 = vadd.f32 %v1689, %v1746
        %v1818 = vadd.f32 %v1690, %v1748
        %v1819 = vadd.f32 %v1691, %v1750
        %v1820 = vadd.f32 %v1692, %v1752
        %v1821 = vadd.f32 %v1693, %v1754
        %v1822 = vadd.f32 %v1694, %v1756
        %v1823 = vadd.f32 %v1695, %v1758
        %v1824 = vadd.f32 %v1696, %v1760
        %v1825 = vmul.f32 %v1793, %v296
        %v1826 = vmul.f32 %v1794, %v297
        %v1827 = vmul.f32 %v1795, %v296
        %v1828 = vmul.f32 %v1796, %v297
        %v1829 = vmul.f32 %v1797, %v296
        %v1830 = vmul.f32 %v1798, %v297
        %v1831 = vmul.f32 %v1799, %v296
        %v1832 = vmul.f32 %v1800, %v297
        %v1833 = vmul.f32 %v1801, %v296
        %v1834 = vmul.f32 %v1802, %v297
        %v1835 = vmul.f32 %v1803, %v296
        %v1836 = vmul.f32 %v1804, %v297
        %v1837 = vmul.f32 %v1805, %v296
        %v1838 = vmul.f32 %v1806, %v297
        %v1839 = vmul.f32 %v1807, %v296
        %v1840 = vmul.f32 %v1808, %v297
        %v1841 = vmul.f32 %v1809, %v296
        %v1842 = vmul.f32 %v1810, %v297
        %v1843 = vmul.f32 %v1811, %v296
        %v1844 = vmul.f32 %v1812, %v297
        %v1845 = vmul.f32 %v1813, %v296
        %v1846 = vmul.f32 %v1814, %v297
        %v1847 = vmul.f32 %v1815, %v296
        %v1848 = vmul.f32 %v1816, %v297
        %v1849 = vmul.f32 %v1817, %v296
        %v1850 = vmul.f32 %v1818, %v297
        %v1851 = vmul.f32 %v1819, %v296
        %v1852 = vmul.f32 %v1820, %v297
        %v1853 = vmul.f32 %v1821, %v296
        %v1854 = vmul.f32 %v1822, %v297
        %v1855 = vmul.f32 %v1823, %v296
        %v1856 = vmul.f32 %v1824, %v297
        %v1857 = vmul.f32 %v1825, %v1833
        %v1858 = vmul.f32 %v1826, %v1834
        %v1859 = vmul.f32 %v1827, %v1835
        %v1860 = vmul.f32 %v1828, %v1836
        %v1861 = vmul.f32 %v1829, %v1837
        %v1862 = vmul.f32 %v1830, %v1838
        %v1863 = vmul.f32 %v1831, %v1839
        %v1864 = vmul.f32 %v1832, %v1840
        %v1865 = vsub.f32 %v1841, %v1857
        %v1866 = vsub.f32 %v1842, %v1858
        %v1867 = vsub.f32 %v1843, %v1859
        %v1868 = vsub.f32 %v1844, %v1860
        %v1869 = vsub.f32 %v1845, %v1861
        %v1870 = vsub.f32 %v1846, %v1862
        %v1871 = vsub.f32 %v1847, %v1863
        %v1872 = vsub.f32 %v1848, %v1864
        %v1873 = vmul.f32 %v1825, %v1825
        %v1874 = vmul.f32 %v1826, %v1826
        %v1875 = vmul.f32 %v1827, %v1827
        %v1876 = vmul.f32 %v1828, %v1828
        %v1877 = vmul.f32 %v1829, %v1829
        %v1878 = vmul.f32 %v1830, %v1830
        %v1879 = vmul.f32 %v1831, %v1831
        %v1880 = vmul.f32 %v1832, %v1832
        %v1881 = vsub.f32 %v1849, %v1873
        %v1882 = vsub.f32 %v1850, %v1874
        %v1883 = vsub.f32 %v1851, %v1875
        %v1884 = vsub.f32 %v1852, %v1876
        %v1885 = vsub.f32 %v1853, %v1877
        %v1886 = vsub.f32 %v1854, %v1878
        %v1887 = vsub.f32 %v1855, %v1879
        %v1888 = vsub.f32 %v1856, %v1880
        %v1889 = vadd.f32 %v1881, 1e-08
        %v1890 = vadd.f32 %v1882, 1e-08
        %v1891 = vadd.f32 %v1883, 1e-08
        %v1892 = vadd.f32 %v1884, 1e-08
        %v1893 = vadd.f32 %v1885, 1e-08
        %v1894 = vadd.f32 %v1886, 1e-08
        %v1895 = vadd.f32 %v1887, 1e-08
        %v1896 = vadd.f32 %v1888, 1e-08
        %v1897 = vrcp.pop %v1889
        %v1898 = vrcp.pop %v1890
        %v1899 = vrcp.pop %v1891
        %v1900 = vrcp.pop %v1892
        %v1901 = vrcp.pop %v1893
        %v1902 = vrcp.pop %v1894
        %v1903 = vrcp.pop %v1895
        %v1904 = vrcp.pop %v1896
        %v1905 = vmul.f32 %v1889, %v1897
        %v1906 = vmul.f32 %v1890, %v1898
        %v1907 = vmul.f32 %v1891, %v1899
        %v1908 = vmul.f32 %v1892, %v1900
        %v1909 = vmul.f32 %v1893, %v1901
        %v1910 = vmul.f32 %v1894, %v1902
        %v1911 = vmul.f32 %v1895, %v1903
        %v1912 = vmul.f32 %v1896, %v1904
        %v1913 = vsub.f32 2.0, %v1905
        %v1914 = vsub.f32 2.0, %v1906
        %v1915 = vsub.f32 2.0, %v1907
        %v1916 = vsub.f32 2.0, %v1908
        %v1917 = vsub.f32 2.0, %v1909
        %v1918 = vsub.f32 2.0, %v1910
        %v1919 = vsub.f32 2.0, %v1911
        %v1920 = vsub.f32 2.0, %v1912
        %v1921 = vmul.f32 %v1897, %v1913
        %v1922 = vmul.f32 %v1898, %v1914
        %v1923 = vmul.f32 %v1899, %v1915
        %v1924 = vmul.f32 %v1900, %v1916
        %v1925 = vmul.f32 %v1901, %v1917
        %v1926 = vmul.f32 %v1902, %v1918
        %v1927 = vmul.f32 %v1903, %v1919
        %v1928 = vmul.f32 %v1904, %v1920
        %v1929 = vmul.f32 %v1865, %v1921
        %v1930 = vmul.f32 %v1866, %v1922
        %v1931 = vmul.f32 %v1867, %v1923
        %v1932 = vmul.f32 %v1868, %v1924
        %v1933 = vmul.f32 %v1869, %v1925
        %v1934 = vmul.f32 %v1870, %v1926
        %v1935 = vmul.f32 %v1871, %v1927
        %v1936 = vmul.f32 %v1872, %v1928
        %v1937 = vmul.f32 %v1929, %v1825
        %v1938 = vmul.f32 %v1930, %v1826
        %v1939 = vmul.f32 %v1931, %v1827
        %v1940 = vmul.f32 %v1932, %v1828
        %v1941 = vmul.f32 %v1933, %v1829
        %v1942 = vmul.f32 %v1934, %v1830
        %v1943 = vmul.f32 %v1935, %v1831
        %v1944 = vmul.f32 %v1936, %v1832
        %v1945 = vsub.f32 %v1833, %v1937
        %v1946 = vsub.f32 %v1834, %v1938
        %v1947 = vsub.f32 %v1835, %v1939
        %v1948 = vsub.f32 %v1836, %v1940
        %v1949 = vsub.f32 %v1837, %v1941
        %v1950 = vsub.f32 %v1838, %v1942
        %v1951 = vsub.f32 %v1839, %v1943
        %v1952 = vsub.f32 %v1840, %v1944
        %v1969 = vrot.slane %v1929, 6
        %v1970 = vrot.slane %v1930, 6
        %v1971 = vsel %vm346, %v1969, %v1970
        %v1972 = vrot.slane %v1931, 6
        %v1973 = vrot.slane %v1932, 6
        %v1974 = vsel %vm346, %v1972, %v1973
        %v1975 = vrot.slane %v1933, 6
        %v1976 = vrot.slane %v1934, 6
        %v1977 = vsel %vm346, %v1975, %v1976
        %v1978 = vrot.slane %v1935, 6
        %v1979 = vrot.slane %v1936, 6
        %v1980 = vsel %vm346, %v1978, %v1979
        %v1981 = vrot.slane %v1945, 6
        %v1982 = vrot.slane %v1946, 6
        %v1983 = vsel %vm346, %v1981, %v1982
        %v1984 = vrot.slane %v1947, 6
        %v1985 = vrot.slane %v1948, 6
        %v1986 = vsel %vm346, %v1984, %v1985
        %v1987 = vrot.slane %v1949, 6
        %v1988 = vrot.slane %v1950, 6
        %v1989 = vsel %vm346, %v1987, %v1988
        %v1990 = vrot.slane %v1951, 6
        %v1991 = vrot.slane %v1952, 6
        %v1992 = vsel %vm346, %v1990, %v1991
        %v2017 = vsel %vm346, 0.0, %v1969
        %v2018 = vsel %vm346, 0.0, %v1972
        %v2019 = vsel %vm346, 0.0, %v1975
        %v2020 = vsel %vm346, 0.0, %v1978
        %v2021 = vsel %vm346, 0.0, %v1981
        %v2022 = vsel %vm346, 0.0, %v1984
        %v2023 = vsel %vm346, 0.0, %v1987
        %v2024 = vsel %vm346, 0.0, %v1990
        %v2025 = vsel %vm346, %v1970, 0.0
        %v2026 = vsel %vm346, %v1973, 0.0
        %v2027 = vsel %vm346, %v1976, 0.0
        %v2028 = vsel %vm346, %v1979, 0.0
        %v2029 = vsel %vm346, %v1982, 0.0
        %v2030 = vsel %vm346, %v1985, 0.0
        %v2031 = vsel %vm346, %v1988, 0.0
        %v2032 = vsel %vm346, %v1991, 0.0
        %v2049 = vrot.slane %v2017, 1
        %v2050 = vrot.slane %v1971, 1
        %v2051 = vsel %vm507, %v2049, %v2050
        %v2052 = vrot.slane %v2025, 1
        %v2053 = vsel %vm507, %v2050, %v2052
        %v2054 = vrot.slane %v2018, 1
        %v2055 = vrot.slane %v1974, 1
        %v2056 = vsel %vm507, %v2054, %v2055
        %v2057 = vrot.slane %v2026, 1
        %v2058 = vsel %vm507, %v2055, %v2057
        %v2059 = vrot.slane %v2019, 1
        %v2060 = vrot.slane %v1977, 1
        %v2061 = vsel %vm507, %v2059, %v2060
        %v2062 = vrot.slane %v2027, 1
        %v2063 = vsel %vm507, %v2060, %v2062
        %v2064 = vrot.slane %v2020, 1
        %v2065 = vrot.slane %v1980, 1
        %v2066 = vsel %vm507, %v2064, %v2065
        %v2067 = vrot.slane %v2028, 1
        %v2068 = vsel %vm507, %v2065, %v2067
        %v2069 = vrot.slane %v2021, 1
        %v2070 = vrot.slane %v1983, 1
        %v2071 = vsel %vm507, %v2069, %v2070
        %v2072 = vrot.slane %v2029, 1
        %v2073 = vsel %vm507, %v2070, %v2072
        %v2074 = vrot.slane %v2022, 1
        %v2075 = vrot.slane %v1986, 1
        %v2076 = vsel %vm507, %v2074, %v2075
        %v2077 = vrot.slane %v2030, 1
        %v2078 = vsel %vm507, %v2075, %v2077
        %v2079 = vrot.slane %v2023, 1
        %v2080 = vrot.slane %v1989, 1
        %v2081 = vsel %vm507, %v2079, %v2080
        %v2082 = vrot.slane %v2031, 1
        %v2083 = vsel %vm507, %v2080, %v2082
        %v2084 = vrot.slane %v2024, 1
        %v2085 = vrot.slane %v1992, 1
        %v2086 = vsel %vm507, %v2084, %v2085
        %v2087 = vrot.slane %v2032, 1
        %v2088 = vsel %vm507, %v2085, %v2087
        %v2105 = vadd.f32 %v2017, %v2051
        %v2106 = vadd.f32 %v1971, %v2053
        %v2107 = vadd.f32 %v2018, %v2056
        %v2108 = vadd.f32 %v1974, %v2058
        %v2109 = vadd.f32 %v2019, %v2061
        %v2110 = vadd.f32 %v1977, %v2063
        %v2111 = vadd.f32 %v2020, %v2066
        %v2112 = vadd.f32 %v1980, %v2068
        %v2113 = vadd.f32 %v2021, %v2071
        %v2114 = vadd.f32 %v1983, %v2073
        %v2115 = vadd.f32 %v2022, %v2076
        %v2116 = vadd.f32 %v1986, %v2078
        %v2117 = vadd.f32 %v2023, %v2081
        %v2118 = vadd.f32 %v1989, %v2083
        %v2119 = vadd.f32 %v2024, %v2086
        %v2120 = vadd.f32 %v1992, %v2088
        %v2121 = vrot.slane %v2017, 2
        %v2122 = vrot.slane %v1971, 2
        %v2123 = vsel %vm652, %v2121, %v2122
        %v2124 = vrot.slane %v2025, 2
        %v2125 = vsel %vm652, %v2122, %v2124
        %v2126 = vrot.slane %v2018, 2
        %v2127 = vrot.slane %v1974, 2
        %v2128 = vsel %vm652, %v2126, %v2127
        %v2129 = vrot.slane %v2026, 2
        %v2130 = vsel %vm652, %v2127, %v2129
        %v2131 = vrot.slane %v2019, 2
        %v2132 = vrot.slane %v1977, 2
        %v2133 = vsel %vm652, %v2131, %v2132
        %v2134 = vrot.slane %v2027, 2
        %v2135 = vsel %vm652, %v2132, %v2134
        %v2136 = vrot.slane %v2020, 2
        %v2137 = vrot.slane %v1980, 2
        %v2138 = vsel %vm652, %v2136, %v2137
        %v2139 = vrot.slane %v2028, 2
        %v2140 = vsel %vm652, %v2137, %v2139
        %v2141 = vrot.slane %v2021, 2
        %v2142 = vrot.slane %v1983, 2
        %v2143 = vsel %vm652, %v2141, %v2142
        %v2144 = vrot.slane %v2029, 2
        %v2145 = vsel %vm652, %v2142, %v2144
        %v2146 = vrot.slane %v2022, 2
        %v2147 = vrot.slane %v1986, 2
        %v2148 = vsel %vm652, %v2146, %v2147
        %v2149 = vrot.slane %v2030, 2
        %v2150 = vsel %vm652, %v2147, %v2149
        %v2151 = vrot.slane %v2023, 2
        %v2152 = vrot.slane %v1989, 2
        %v2153 = vsel %vm652, %v2151, %v2152
        %v2154 = vrot.slane %v2031, 2
        %v2155 = vsel %vm652, %v2152, %v2154
        %v2156 = vrot.slane %v2024, 2
        %v2157 = vrot.slane %v1992, 2
        %v2158 = vsel %vm652, %v2156, %v2157
        %v2159 = vrot.slane %v2032, 2
        %v2160 = vsel %vm652, %v2157, %v2159
        %v2177 = vadd.f32 %v2105, %v2123
        %v2178 = vadd.f32 %v2106, %v2125
        %v2179 = vadd.f32 %v2107, %v2128
        %v2180 = vadd.f32 %v2108, %v2130
        %v2181 = vadd.f32 %v2109, %v2133
        %v2182 = vadd.f32 %v2110, %v2135
        %v2183 = vadd.f32 %v2111, %v2138
        %v2184 = vadd.f32 %v2112, %v2140
        %v2185 = vadd.f32 %v2113, %v2143
        %v2186 = vadd.f32 %v2114, %v2145
        %v2187 = vadd.f32 %v2115, %v2148
        %v2188 = vadd.f32 %v2116, %v2150
        %v2189 = vadd.f32 %v2117, %v2153
        %v2190 = vadd.f32 %v2118, %v2155
        %v2191 = vadd.f32 %v2119, %v2158
        %v2192 = vadd.f32 %v2120, %v2160
        %v2193 = vrot.slane %v2017, 3
        %v2194 = vrot.slane %v1971, 3
        %v2195 = vsel %vm797, %v2193, %v2194
        %v2196 = vrot.slane %v2025, 3
        %v2197 = vsel %vm797, %v2194, %v2196
        %v2198 = vrot.slane %v2018, 3
        %v2199 = vrot.slane %v1974, 3
        %v2200 = vsel %vm797, %v2198, %v2199
        %v2201 = vrot.slane %v2026, 3
        %v2202 = vsel %vm797, %v2199, %v2201
        %v2203 = vrot.slane %v2019, 3
        %v2204 = vrot.slane %v1977, 3
        %v2205 = vsel %vm797, %v2203, %v2204
        %v2206 = vrot.slane %v2027, 3
        %v2207 = vsel %vm797, %v2204, %v2206
        %v2208 = vrot.slane %v2020, 3
        %v2209 = vrot.slane %v1980, 3
        %v2210 = vsel %vm797, %v2208, %v2209
        %v2211 = vrot.slane %v2028, 3
        %v2212 = vsel %vm797, %v2209, %v2211
        %v2213 = vrot.slane %v2021, 3
        %v2214 = vrot.slane %v1983, 3
        %v2215 = vsel %vm797, %v2213, %v2214
        %v2216 = vrot.slane %v2029, 3
        %v2217 = vsel %vm797, %v2214, %v2216
        %v2218 = vrot.slane %v2022, 3
        %v2219 = vrot.slane %v1986, 3
        %v2220 = vsel %vm797, %v2218, %v2219
        %v2221 = vrot.slane %v2030, 3
        %v2222 = vsel %vm797, %v2219, %v2221
        %v2223 = vrot.slane %v2023, 3
        %v2224 = vrot.slane %v1989, 3
        %v2225 = vsel %vm797, %v2223, %v2224
        %v2226 = vrot.slane %v2031, 3
        %v2227 = vsel %vm797, %v2224, %v2226
        %v2228 = vrot.slane %v2024, 3
        %v2229 = vrot.slane %v1992, 3
        %v2230 = vsel %vm797, %v2228, %v2229
        %v2231 = vrot.slane %v2032, 3
        %v2232 = vsel %vm797, %v2229, %v2231
        %v2249 = vadd.f32 %v2177, %v2195
        %v2250 = vadd.f32 %v2178, %v2197
        %v2251 = vadd.f32 %v2179, %v2200
        %v2252 = vadd.f32 %v2180, %v2202
        %v2253 = vadd.f32 %v2181, %v2205
        %v2254 = vadd.f32 %v2182, %v2207
        %v2255 = vadd.f32 %v2183, %v2210
        %v2256 = vadd.f32 %v2184, %v2212
        %v2257 = vadd.f32 %v2185, %v2215
        %v2258 = vadd.f32 %v2186, %v2217
        %v2259 = vadd.f32 %v2187, %v2220
        %v2260 = vadd.f32 %v2188, %v2222
        %v2261 = vadd.f32 %v2189, %v2225
        %v2262 = vadd.f32 %v2190, %v2227
        %v2263 = vadd.f32 %v2191, %v2230
        %v2264 = vadd.f32 %v2192, %v2232
        %v2265 = vrot.slane %v2017, 4
        %v2266 = vrot.slane %v1971, 4
        %v2267 = vsel %vm942, %v2265, %v2266
        %v2268 = vrot.slane %v2025, 4
        %v2269 = vsel %vm942, %v2266, %v2268
        %v2270 = vrot.slane %v2018, 4
        %v2271 = vrot.slane %v1974, 4
        %v2272 = vsel %vm942, %v2270, %v2271
        %v2273 = vrot.slane %v2026, 4
        %v2274 = vsel %vm942, %v2271, %v2273
        %v2275 = vrot.slane %v2019, 4
        %v2276 = vrot.slane %v1977, 4
        %v2277 = vsel %vm942, %v2275, %v2276
        %v2278 = vrot.slane %v2027, 4
        %v2279 = vsel %vm942, %v2276, %v2278
        %v2280 = vrot.slane %v2020, 4
        %v2281 = vrot.slane %v1980, 4
        %v2282 = vsel %vm942, %v2280, %v2281
        %v2283 = vrot.slane %v2028, 4
        %v2284 = vsel %vm942, %v2281, %v2283
        %v2285 = vrot.slane %v2021, 4
        %v2286 = vrot.slane %v1983, 4
        %v2287 = vsel %vm942, %v2285, %v2286
        %v2288 = vrot.slane %v2029, 4
        %v2289 = vsel %vm942, %v2286, %v2288
        %v2290 = vrot.slane %v2022, 4
        %v2291 = vrot.slane %v1986, 4
        %v2292 = vsel %vm942, %v2290, %v2291
        %v2293 = vrot.slane %v2030, 4
        %v2294 = vsel %vm942, %v2291, %v2293
        %v2295 = vrot.slane %v2023, 4
        %v2296 = vrot.slane %v1989, 4
        %v2297 = vsel %vm942, %v2295, %v2296
        %v2298 = vrot.slane %v2031, 4
        %v2299 = vsel %vm942, %v2296, %v2298
        %v2300 = vrot.slane %v2024, 4
        %v2301 = vrot.slane %v1992, 4
        %v2302 = vsel %vm942, %v2300, %v2301
        %v2303 = vrot.slane %v2032, 4
        %v2304 = vsel %vm942, %v2301, %v2303
        %v2321 = vadd.f32 %v2249, %v2267
        %v2322 = vadd.f32 %v2250, %v2269
        %v2323 = vadd.f32 %v2251, %v2272
        %v2324 = vadd.f32 %v2252, %v2274
        %v2325 = vadd.f32 %v2253, %v2277
        %v2326 = vadd.f32 %v2254, %v2279
        %v2327 = vadd.f32 %v2255, %v2282
        %v2328 = vadd.f32 %v2256, %v2284
        %v2329 = vadd.f32 %v2257, %v2287
        %v2330 = vadd.f32 %v2258, %v2289
        %v2331 = vadd.f32 %v2259, %v2292
        %v2332 = vadd.f32 %v2260, %v2294
        %v2333 = vadd.f32 %v2261, %v2297
        %v2334 = vadd.f32 %v2262, %v2299
        %v2335 = vadd.f32 %v2263, %v2302
        %v2336 = vadd.f32 %v2264, %v2304
        %2353 = vrot.lane.b32.xlu0 %v2321, 2
        %v2354 = vpop.permute.xlu0 %2353
        %2355 = vrot.lane.b32.xlu0 %v2322, 2
        %v2356 = vpop.permute.xlu0 %2355
        %2357 = vrot.lane.b32.xlu0 %v2323, 2
        %v2358 = vpop.permute.xlu0 %2357
        %2359 = vrot.lane.b32.xlu0 %v2324, 2
        %v2360 = vpop.permute.xlu0 %2359
        %2361 = vrot.lane.b32.xlu0 %v2325, 2
        %v2362 = vpop.permute.xlu0 %2361
        %2363 = vrot.lane.b32.xlu0 %v2326, 2
        %v2364 = vpop.permute.xlu0 %2363
        %2365 = vrot.lane.b32.xlu0 %v2327, 2
        %v2366 = vpop.permute.xlu0 %2365
        %2367 = vrot.lane.b32.xlu0 %v2328, 2
        %v2368 = vpop.permute.xlu0 %2367
        %2369 = vrot.lane.b32.xlu0 %v2329, 2
        %v2370 = vpop.permute.xlu0 %2369
        %2371 = vrot.lane.b32.xlu0 %v2330, 2
        %v2372 = vpop.permute.xlu0 %2371
        %2373 = vrot.lane.b32.xlu0 %v2331, 2
        %v2374 = vpop.permute.xlu0 %2373
        %2375 = vrot.lane.b32.xlu0 %v2332, 2
        %v2376 = vpop.permute.xlu0 %2375
        %2377 = vrot.lane.b32.xlu0 %v2333, 2
        %v2378 = vpop.permute.xlu0 %2377
        %2379 = vrot.lane.b32.xlu0 %v2334, 2
        %v2380 = vpop.permute.xlu0 %2379
        %2381 = vrot.lane.b32.xlu0 %v2335, 2
        %v2382 = vpop.permute.xlu0 %2381
        %2383 = vrot.lane.b32.xlu0 %v2336, 2
        %v2384 = vpop.permute.xlu0 %2383
        %v2401 = vsel %vm1215, 0.0, %v2354
        %v2402 = vsel %vm1215, 0.0, %v2356
        %v2403 = vsel %vm1215, 0.0, %v2358
        %v2404 = vsel %vm1215, 0.0, %v2360
        %v2405 = vsel %vm1215, 0.0, %v2362
        %v2406 = vsel %vm1215, 0.0, %v2364
        %v2407 = vsel %vm1215, 0.0, %v2366
        %v2408 = vsel %vm1215, 0.0, %v2368
        %v2409 = vsel %vm1215, 0.0, %v2370
        %v2410 = vsel %vm1215, 0.0, %v2372
        %v2411 = vsel %vm1215, 0.0, %v2374
        %v2412 = vsel %vm1215, 0.0, %v2376
        %v2413 = vsel %vm1215, 0.0, %v2378
        %v2414 = vsel %vm1215, 0.0, %v2380
        %v2415 = vsel %vm1215, 0.0, %v2382
        %v2416 = vsel %vm1215, 0.0, %v2384
        %v2417 = vsel %vm1248, %v2401, 0.0
        %v2418 = vsel %vm1248, %v2402, 0.0
        %v2419 = vsel %vm1248, %v2403, 0.0
        %v2420 = vsel %vm1248, %v2404, 0.0
        %v2421 = vsel %vm1248, %v2405, 0.0
        %v2422 = vsel %vm1248, %v2406, 0.0
        %v2423 = vsel %vm1248, %v2407, 0.0
        %v2424 = vsel %vm1248, %v2408, 0.0
        %v2425 = vsel %vm1248, %v2409, 0.0
        %v2426 = vsel %vm1248, %v2410, 0.0
        %v2427 = vsel %vm1248, %v2411, 0.0
        %v2428 = vsel %vm1248, %v2412, 0.0
        %v2429 = vsel %vm1248, %v2413, 0.0
        %v2430 = vsel %vm1248, %v2414, 0.0
        %v2431 = vsel %vm1248, %v2415, 0.0
        %v2432 = vsel %vm1248, %v2416, 0.0
        %2449 = vrot.lane.b32.xlu0 %v2417, 127
        %v2450 = vpop.permute.xlu0 %2449
        %2451 = vrot.lane.b32.xlu0 %v2418, 127
        %v2452 = vpop.permute.xlu0 %2451
        %2453 = vrot.lane.b32.xlu0 %v2419, 127
        %v2454 = vpop.permute.xlu0 %2453
        %2455 = vrot.lane.b32.xlu0 %v2420, 127
        %v2456 = vpop.permute.xlu0 %2455
        %2457 = vrot.lane.b32.xlu0 %v2421, 127
        %v2458 = vpop.permute.xlu0 %2457
        %2459 = vrot.lane.b32.xlu0 %v2422, 127
        %v2460 = vpop.permute.xlu0 %2459
        %2461 = vrot.lane.b32.xlu0 %v2423, 127
        %v2462 = vpop.permute.xlu0 %2461
        %2463 = vrot.lane.b32.xlu0 %v2424, 127
        %v2464 = vpop.permute.xlu0 %2463
        %2465 = vrot.lane.b32.xlu0 %v2425, 127
        %v2466 = vpop.permute.xlu0 %2465
        %2467 = vrot.lane.b32.xlu0 %v2426, 127
        %v2468 = vpop.permute.xlu0 %2467
        %2469 = vrot.lane.b32.xlu0 %v2427, 127
        %v2470 = vpop.permute.xlu0 %2469
        %2471 = vrot.lane.b32.xlu0 %v2428, 127
        %v2472 = vpop.permute.xlu0 %2471
        %2473 = vrot.lane.b32.xlu0 %v2429, 127
        %v2474 = vpop.permute.xlu0 %2473
        %2475 = vrot.lane.b32.xlu0 %v2430, 127
        %v2476 = vpop.permute.xlu0 %2475
        %2477 = vrot.lane.b32.xlu0 %v2431, 127
        %v2478 = vpop.permute.xlu0 %2477
        %2479 = vrot.lane.b32.xlu0 %v2432, 127
        %v2480 = vpop.permute.xlu0 %2479
        %v2497 = vadd.f32 %v2417, %v2450
        %v2498 = vadd.f32 %v2418, %v2452
        %v2499 = vadd.f32 %v2419, %v2454
        %v2500 = vadd.f32 %v2420, %v2456
        %v2501 = vadd.f32 %v2421, %v2458
        %v2502 = vadd.f32 %v2422, %v2460
        %v2503 = vadd.f32 %v2423, %v2462
        %v2504 = vadd.f32 %v2424, %v2464
        %v2505 = vadd.f32 %v2425, %v2466
        %v2506 = vadd.f32 %v2426, %v2468
        %v2507 = vadd.f32 %v2427, %v2470
        %v2508 = vadd.f32 %v2428, %v2472
        %v2509 = vadd.f32 %v2429, %v2474
        %v2510 = vadd.f32 %v2430, %v2476
        %v2511 = vadd.f32 %v2431, %v2478
        %v2512 = vadd.f32 %v2432, %v2480
        %2513 = vrot.lane.b32.xlu0 %v2417, 126
        %v2514 = vpop.permute.xlu0 %2513
        %2515 = vrot.lane.b32.xlu0 %v2418, 126
        %v2516 = vpop.permute.xlu0 %2515
        %2517 = vrot.lane.b32.xlu0 %v2419, 126
        %v2518 = vpop.permute.xlu0 %2517
        %2519 = vrot.lane.b32.xlu0 %v2420, 126
        %v2520 = vpop.permute.xlu0 %2519
        %2521 = vrot.lane.b32.xlu0 %v2421, 126
        %v2522 = vpop.permute.xlu0 %2521
        %2523 = vrot.lane.b32.xlu0 %v2422, 126
        %v2524 = vpop.permute.xlu0 %2523
        %2525 = vrot.lane.b32.xlu0 %v2423, 126
        %v2526 = vpop.permute.xlu0 %2525
        %2527 = vrot.lane.b32.xlu0 %v2424, 126
        %v2528 = vpop.permute.xlu0 %2527
        %2529 = vrot.lane.b32.xlu0 %v2425, 126
        %v2530 = vpop.permute.xlu0 %2529
        %2531 = vrot.lane.b32.xlu0 %v2426, 126
        %v2532 = vpop.permute.xlu0 %2531
        %2533 = vrot.lane.b32.xlu0 %v2427, 126
        %v2534 = vpop.permute.xlu0 %2533
        %2535 = vrot.lane.b32.xlu0 %v2428, 126
        %v2536 = vpop.permute.xlu0 %2535
        %2537 = vrot.lane.b32.xlu0 %v2429, 126
        %v2538 = vpop.permute.xlu0 %2537
        %2539 = vrot.lane.b32.xlu0 %v2430, 126
        %v2540 = vpop.permute.xlu0 %2539
        %2541 = vrot.lane.b32.xlu0 %v2431, 126
        %v2542 = vpop.permute.xlu0 %2541
        %2543 = vrot.lane.b32.xlu0 %v2432, 126
        %v2544 = vpop.permute.xlu0 %2543
        %v2561 = vadd.f32 %v2497, %v2514
        %v2562 = vadd.f32 %v2498, %v2516
        %v2563 = vadd.f32 %v2499, %v2518
        %v2564 = vadd.f32 %v2500, %v2520
        %v2565 = vadd.f32 %v2501, %v2522
        %v2566 = vadd.f32 %v2502, %v2524
        %v2567 = vadd.f32 %v2503, %v2526
        %v2568 = vadd.f32 %v2504, %v2528
        %v2569 = vadd.f32 %v2505, %v2530
        %v2570 = vadd.f32 %v2506, %v2532
        %v2571 = vadd.f32 %v2507, %v2534
        %v2572 = vadd.f32 %v2508, %v2536
        %v2573 = vadd.f32 %v2509, %v2538
        %v2574 = vadd.f32 %v2510, %v2540
        %v2575 = vadd.f32 %v2511, %v2542
        %v2576 = vadd.f32 %v2512, %v2544
        %2577 = vrot.lane.b32.xlu0 %v2417, 125
        %v2578 = vpop.permute.xlu0 %2577
        %2579 = vrot.lane.b32.xlu0 %v2418, 125
        %v2580 = vpop.permute.xlu0 %2579
        %2581 = vrot.lane.b32.xlu0 %v2419, 125
        %v2582 = vpop.permute.xlu0 %2581
        %2583 = vrot.lane.b32.xlu0 %v2420, 125
        %v2584 = vpop.permute.xlu0 %2583
        %2585 = vrot.lane.b32.xlu0 %v2421, 125
        %v2586 = vpop.permute.xlu0 %2585
        %2587 = vrot.lane.b32.xlu0 %v2422, 125
        %v2588 = vpop.permute.xlu0 %2587
        %2589 = vrot.lane.b32.xlu0 %v2423, 125
        %v2590 = vpop.permute.xlu0 %2589
        %2591 = vrot.lane.b32.xlu0 %v2424, 125
        %v2592 = vpop.permute.xlu0 %2591
        %2593 = vrot.lane.b32.xlu0 %v2425, 125
        %v2594 = vpop.permute.xlu0 %2593
        %2595 = vrot.lane.b32.xlu0 %v2426, 125
        %v2596 = vpop.permute.xlu0 %2595
        %2597 = vrot.lane.b32.xlu0 %v2427, 125
        %v2598 = vpop.permute.xlu0 %2597
        %2599 = vrot.lane.b32.xlu0 %v2428, 125
        %v2600 = vpop.permute.xlu0 %2599
        %2601 = vrot.lane.b32.xlu0 %v2429, 125
        %v2602 = vpop.permute.xlu0 %2601
        %2603 = vrot.lane.b32.xlu0 %v2430, 125
        %v2604 = vpop.permute.xlu0 %2603
        %2605 = vrot.lane.b32.xlu0 %v2431, 125
        %v2606 = vpop.permute.xlu0 %2605
        %2607 = vrot.lane.b32.xlu0 %v2432, 125
        %v2608 = vpop.permute.xlu0 %2607
        %v2625 = vadd.f32 %v2561, %v2578
        %v2626 = vadd.f32 %v2562, %v2580
        %v2627 = vadd.f32 %v2563, %v2582
        %v2628 = vadd.f32 %v2564, %v2584
        %v2629 = vadd.f32 %v2565, %v2586
        %v2630 = vadd.f32 %v2566, %v2588
        %v2631 = vadd.f32 %v2567, %v2590
        %v2632 = vadd.f32 %v2568, %v2592
        %v2633 = vadd.f32 %v2569, %v2594
        %v2634 = vadd.f32 %v2570, %v2596
        %v2635 = vadd.f32 %v2571, %v2598
        %v2636 = vadd.f32 %v2572, %v2600
        %v2637 = vadd.f32 %v2573, %v2602
        %v2638 = vadd.f32 %v2574, %v2604
        %v2639 = vadd.f32 %v2575, %v2606
        %v2640 = vadd.f32 %v2576, %v2608
        %2641 = vrot.lane.b32.xlu0 %v2417, 124
        %v2642 = vpop.permute.xlu0 %2641
        %2643 = vrot.lane.b32.xlu0 %v2418, 124
        %v2644 = vpop.permute.xlu0 %2643
        %2645 = vrot.lane.b32.xlu0 %v2419, 124
        %v2646 = vpop.permute.xlu0 %2645
        %2647 = vrot.lane.b32.xlu0 %v2420, 124
        %v2648 = vpop.permute.xlu0 %2647
        %2649 = vrot.lane.b32.xlu0 %v2421, 124
        %v2650 = vpop.permute.xlu0 %2649
        %2651 = vrot.lane.b32.xlu0 %v2422, 124
        %v2652 = vpop.permute.xlu0 %2651
        %2653 = vrot.lane.b32.xlu0 %v2423, 124
        %v2654 = vpop.permute.xlu0 %2653
        %2655 = vrot.lane.b32.xlu0 %v2424, 124
        %v2656 = vpop.permute.xlu0 %2655
        %2657 = vrot.lane.b32.xlu0 %v2425, 124
        %v2658 = vpop.permute.xlu0 %2657
        %2659 = vrot.lane.b32.xlu0 %v2426, 124
        %v2660 = vpop.permute.xlu0 %2659
        %2661 = vrot.lane.b32.xlu0 %v2427, 124
        %v2662 = vpop.permute.xlu0 %2661
        %2663 = vrot.lane.b32.xlu0 %v2428, 124
        %v2664 = vpop.permute.xlu0 %2663
        %2665 = vrot.lane.b32.xlu0 %v2429, 124
        %v2666 = vpop.permute.xlu0 %2665
        %2667 = vrot.lane.b32.xlu0 %v2430, 124
        %v2668 = vpop.permute.xlu0 %2667
        %2669 = vrot.lane.b32.xlu0 %v2431, 124
        %v2670 = vpop.permute.xlu0 %2669
        %2671 = vrot.lane.b32.xlu0 %v2432, 124
        %v2672 = vpop.permute.xlu0 %2671
        %v2689 = vadd.f32 %v2625, %v2642
        %v2690 = vadd.f32 %v2626, %v2644
        %v2691 = vadd.f32 %v2627, %v2646
        %v2692 = vadd.f32 %v2628, %v2648
        %v2693 = vadd.f32 %v2629, %v2650
        %v2694 = vadd.f32 %v2630, %v2652
        %v2695 = vadd.f32 %v2631, %v2654
        %v2696 = vadd.f32 %v2632, %v2656
        %v2697 = vadd.f32 %v2633, %v2658
        %v2698 = vadd.f32 %v2634, %v2660
        %v2699 = vadd.f32 %v2635, %v2662
        %v2700 = vadd.f32 %v2636, %v2664
        %v2701 = vadd.f32 %v2637, %v2666
        %v2702 = vadd.f32 %v2638, %v2668
        %v2703 = vadd.f32 %v2639, %v2670
        %v2704 = vadd.f32 %v2640, %v2672
        %v2705 = vmul.f32 %v2689, %v296
        %v2706 = vmul.f32 %v2690, %v297
        %v2707 = vmul.f32 %v2691, %v296
        %v2708 = vmul.f32 %v2692, %v297
        %v2709 = vmul.f32 %v2693, %v296
        %v2710 = vmul.f32 %v2694, %v297
        %v2711 = vmul.f32 %v2695, %v296
        %v2712 = vmul.f32 %v2696, %v297
        %v2713 = vmul.f32 %v2697, %v296
        %v2714 = vmul.f32 %v2698, %v297
        %v2715 = vmul.f32 %v2699, %v296
        %v2716 = vmul.f32 %v2700, %v297
        %v2717 = vmul.f32 %v2701, %v296
        %v2718 = vmul.f32 %v2702, %v297
        %v2719 = vmul.f32 %v2703, %v296
        %v2720 = vmul.f32 %v2704, %v297
        %v2721 = vmul.f32 %v2705, %v261
        %v2722 = vmul.f32 %v2706, %v262
        %v2723 = vmul.f32 %v2707, %v263
        %v2724 = vmul.f32 %v2708, %v264
        %v2725 = vmul.f32 %v2709, %v265
        %v2726 = vmul.f32 %v2710, %v266
        %v2727 = vmul.f32 %v2711, %v267
        %v2728 = vmul.f32 %v2712, %v268
        %v2729 = vadd.f32 %v2721, %v2713
        %v2730 = vadd.f32 %v2722, %v2714
        %v2731 = vadd.f32 %v2723, %v2715
        %v2732 = vadd.f32 %v2724, %v2716
        %v2733 = vadd.f32 %v2725, %v2717
        %v2734 = vadd.f32 %v2726, %v2718
        %v2735 = vadd.f32 %v2727, %v2719
        %v2736 = vadd.f32 %v2728, %v2720
        %vm2737 = vcmask 130048
        %2738 = vst.msk [vmem:[%s257] sm:$0xff] %vm2737, %v2729
        %2739 = vst.msk [vmem:[%s257 + $0x8] sm:$0xff] %vm2737, %v2730
        %2740 = vst.msk [vmem:[%s257 + $0x10] sm:$0xff] %vm2737, %v2731
        %2741 = vst.msk [vmem:[%s257 + $0x18] sm:$0xff] %vm2737, %v2732
        %2742 = vst.msk [vmem:[%s257 + $0x20] sm:$0xff] %vm2737, %v2733
        %2743 = vst.msk [vmem:[%s257 + $0x28] sm:$0xff] %vm2737, %v2734
        %2744 = vst.msk [vmem:[%s257 + $0x30] sm:$0xff] %vm2737, %v2735
        %2745 = vst.msk [vmem:[%s257 + $0x38] sm:$0xff] %vm2737, %v2736
        %s2746 = sand.u32 %s126, 1
        %s2747 = scalar_lea.sflag [#allocation4], %s2746
        %s2748 = sand.u32 %s126, 1
        %s2749 = smul.addr %s2748, 64
        %s2750 = scalar_lea.vmem [#allocation7], %s2749
        // Predicated region
        $region45: #{tpu_custom_call.1} parent=35 // pred_check
          %p2751 = pneg %p136
        $region46: #{tpu_custom_call.1} parent=35 // pred_check_branch
          %2753 = sbr.rel (%p2751) target = $region48
        $region47: #{tpu_custom_call.1} parent=35 // pred_region
          %s2754 = smul.u32 4, %s24
          %s2756 = ssub.s32 1024, 1024
          %2757 = vsyncadd %s2747, %s2756
          %s2758 = smul.addr %s2754, 2
          %s2759 = smul.addr %s2758, 128
          %s2760 = scalar_lea.hbm %s4, %s2759
          %s2761 = sshll.u32 %s2750, 4
          %s2762 = int_to_ptr.vmem [resolvable:$true] %s2761
          %2767 = dma.vmem_to_hbm [thread:$0]  %s2762, 1024, %s2760, %s2747, 128, 128, 8
        $region48: #{tpu_custom_call.1} parent=35 // pred_fallthru
          _
      $region36: #{tpu_custom_call.1} parent=5 // pred_fallthru
        _
      %p2768 = scmp.le.s32.totalorder 2, %s19
      // Predicated region
      $region49: #{tpu_custom_call.1} parent=5 // pred_check
        %p2769 = pneg %p2768
      $region50: #{tpu_custom_call.1} parent=5 // pred_check_branch
        %2771 = sbr.rel (%p2769) target = $region52
      $region51: #{tpu_custom_call.1} parent=5 // pred_region
        %s2772 = ssub.s32 %s19, 2
        // Predicated region
        $region53: #{tpu_custom_call.1} parent=51 // pred_check
          %p2773 = pneg %p142
        $region54: #{tpu_custom_call.1} parent=51 // pred_check_branch
          %2775 = sbr.rel (%p2773) target = $region56
        $region55: #{tpu_custom_call.1} parent=51 // pred_region
          %s2776 = sand.u32 %s127, 1
          %s2777 = scalar_lea.sflag [#allocation4], %s2776
          %s2778 = sand.u32 %s127, 1
          %s2779 = smul.addr %s2778, 64
          %s2780 = scalar_lea.vmem [#allocation7], %s2779
          %2781 = dma.done %s2777, 1024
        $region56: #{tpu_custom_call.1} parent=51 // pred_fallthru
          _
      $region52: #{tpu_custom_call.1} parent=5 // pred_fallthru
        _
    $region6: #{tpu_custom_call.1} parent=1 // loop_footer
      %s23 = sadd.s32 1, %s19
    $region7: #{tpu_custom_call.1} parent=1 // loop_footer_branch
      %18 = sbr.rel target = $region3
    $region8: #{tpu_custom_call.1} parent=1 // loop_exit
      _
    %2782 = vsyncpa [#allocation3], 1
    %s2783 = scalar_lea.sflag [#allocation3], 1
    %2784 = vsyncpa %s2783, 1
    %2785 = vsyncpa [#allocation6], 1
    %s2786 = scalar_lea.sflag [#allocation6], 1
    %2787 = vsyncpa %s2786, 1
    %2788 = vsyncpa [#allocation4], 1
    %s2789 = scalar_lea.sflag [#allocation4], 1
    %2790 = vsyncpa %s2789, 1

</llo_original>
